<compile_context>
chip_gen: v5e
topology: v5e:2x2
jax: 0.10.0
libtpu: 0.0.40
codegen_flags: <defaults>
</compile_context>

<pallas_src>
import functools

import jax
import jax.numpy as jnp
from jax import lax
from jax.experimental import pallas as pl
from jax.experimental.pallas import tpu as pltpu


INPUT_SIZE = 3 * 14 * 2    # 84
HIDDEN_SIZE = 128
NUM_CLASSES = 7
NUM_LAYERS = 1


# ----------------------------------------------------------------------------
# Pallas kernel
# ----------------------------------------------------------------------------
def _bilstm_fc_kernel(x_ref,      # (T*B, I_pad)  time-major flattened, zero-padded input
                      wall_ref,   # (I_pad, 8H)   [fwd W_ih^T | bwd W_ih^T], gate order [i,f,o,g]
                      whhf_ref,   # (H, 4H)       forward W_hh^T, gate order [i,f,o,g]
                      ball_ref,   # (1, 8H)       [fwd b_ih+b_hh | bwd b_ih+b_hh], [i,f,o,g]
                      fcw_ref,    # (2H, C)       fc weight^T
                      fcb_ref,    # (1, C)        fc bias
                      out_ref,    # (B, C)        logits
                      gxf_ref,    # scratch (T*B, 4H) forward x-projection gates
                      *, T, B, H):
    # --- Hoisted input projection: one big MXU pass for both directions + bias.
    gates_all = (jnp.dot(x_ref[...], wall_ref[...],
                         preferred_element_type=jnp.float32)
                 + ball_ref[...])                              # (T*B, 8H)
    gxf_ref[...] = gates_all[:, :4 * H]                        # forward gates, all t

    # --- Backward direction: only out[:, -1, H:] is needed = one cell step on
    #     x[T-1] with zero (h, c); h0 @ W_hh_b == 0, so gates are just the
    #     x-projection, and c_new = i * g.
    gb = gates_all[(T - 1) * B:T * B, 4 * H:]                  # (B, 4H)
    sb = jax.nn.sigmoid(gb[:, :3 * H])                         # [i, f, o]
    gb_g = jnp.tanh(gb[:, 3 * H:])
    h_bwd = sb[:, 2 * H:3 * H] * jnp.tanh(sb[:, :H] * gb_g)

    # --- Forward recurrence (only the h @ W_hh matmul is on the critical path).
    whhf = whhf_ref[...]
    h0 = jnp.zeros((B, H), jnp.float32)
    c0 = jnp.zeros((B, H), jnp.float32)

    def fwd_step(t, carry):
        h, c = carry
        gates = gxf_ref[pl.ds(t * B, B), :] + jnp.dot(
            h, whhf, preferred_element_type=jnp.float32)       # (B, 4H)
        s = jax.nn.sigmoid(gates[:, :3 * H])                   # [i, f, o] in one EUP pass
        g = jnp.tanh(gates[:, 3 * H:])
        i = s[:, :H]
        f = s[:, H:2 * H]
        o = s[:, 2 * H:3 * H]
        c_new = f * c + i * g
        h_new = o * jnp.tanh(c_new)
        return h_new, c_new

    h_fwd, _ = lax.fori_loop(0, T, fwd_step, (h0, c0), unroll=True)

    # --- Final linear on concat([h_fwd, h_bwd]) without materializing the concat.
    logits = (jnp.dot(h_fwd, fcw_ref[0:H, :], preferred_element_type=jnp.float32)
              + jnp.dot(h_bwd, fcw_ref[H:2 * H, :], preferred_element_type=jnp.float32)
              + fcb_ref[...])
    out_ref[...] = logits


# ----------------------------------------------------------------------------
# Wrapper
# ----------------------------------------------------------------------------
@jax.jit
def bidirectional_lstm_action_recognition(x, params):
    """x: (B, T, I) float32 (PyTorch batch_first layout). Returns (B, num_classes)."""
    B, T, I = x.shape
    H = params["w_hh_f"].shape[1]
    C = params["fc_w"].shape[0]
    I_pad = ((I + 127) // 128) * 128

    def reorder(w):  # last dim is 4H in PyTorch order [i, f, g, o] -> [i, f, o, g]
        return jnp.concatenate(
            [w[..., :2 * H], w[..., 3 * H:4 * H], w[..., 2 * H:3 * H]], axis=-1)

    wihf_t = reorder(jnp.transpose(params["w_ih_f"], (1, 0)))    # (I, 4H)
    wihb_t = reorder(jnp.transpose(params["w_ih_b"], (1, 0)))    # (I, 4H)
    whhf_t = reorder(jnp.transpose(params["w_hh_f"], (1, 0)))    # (H, 4H)
    bf = reorder((params["b_ih_f"] + params["b_hh_f"]).reshape(1, 4 * H))
    bb = reorder((params["b_ih_b"] + params["b_hh_b"]).reshape(1, 4 * H))

    # Combined [fwd | bwd] input-projection weights, K-dim zero-padded to 128.
    w_all = jnp.concatenate([wihf_t, wihb_t], axis=1)            # (I, 8H)
    w_all = jnp.pad(w_all, ((0, I_pad - I), (0, 0)))             # (I_pad, 8H)
    b_all = jnp.concatenate([bf, bb], axis=1)                    # (1, 8H)

    fcw_t = jnp.transpose(params["fc_w"], (1, 0))                # (2H, C)
    fcb = params["fc_b"].reshape(1, C)

    # Time-major flattening so timestep t occupies rows [t*B, (t+1)*B); cheap
    # XLA layout prep at these shapes, lets the kernel do one dense projection
    # and contiguous per-step row slices.
    x_tm = jnp.transpose(x, (1, 0, 2)).reshape(T * B, I)
    x_tm = jnp.pad(x_tm, ((0, 0), (0, I_pad - I)))               # (T*B, I_pad)

    kernel = functools.partial(_bilstm_fc_kernel, T=T, B=B, H=H)
    vmem = pl.BlockSpec(memory_space=pltpu.MemorySpace.VMEM)
    return pl.pallas_call(
        kernel,
        out_shape=jax.ShapeDtypeStruct((B, C), jnp.float32),
        in_specs=[vmem] * 6,
        out_specs=vmem,
        scratch_shapes=[pltpu.VMEM((T * B, 4 * H), jnp.float32)],
    )(x_tm, w_all, whhf_t, b_all, fcw_t, fcb)


# ----------------------------------------------------------------------------
# Pure-JAX reference (full bidirectional LSTM, PyTorch semantics) for checking
# ----------------------------------------------------------------------------
def _ref_forward(x, params):
    B, T, I = x.shape
    H = params["w_hh_f"].shape[1]

    def cell(xt, h, c, wih, whh, bih, bhh):
        gates = xt @ wih.T + h @ whh.T + bih + bhh
        i = jax.nn.sigmoid(gates[:, 0 * H:1 * H])
        f = jax.nn.sigmoid(gates[:, 1 * H:2 * H])
        g = jnp.tanh(gates[:, 2 * H:3 * H])
        o = jax.nn.sigmoid(gates[:, 3 * H:4 * H])
        c_new = f * c + i * g
        return o * jnp.tanh(c_new), c_new

    h0 = jnp.zeros((B, H), jnp.float32)
    c0 = jnp.zeros((B, H), jnp.float32)
    x_tm = jnp.transpose(x, (1, 0, 2))

    def scan_dir(xs, wih, whh, bih, bhh):
        def step(carry, xt):
            h, c = carry
            h, c = cell(xt, h, c, wih, whh, bih, bhh)
            return (h, c), h
        _, hs = lax.scan(step, (h0, c0), xs)
        return hs

    hs_f = scan_dir(x_tm, params["w_ih_f"], params["w_hh_f"],
                    params["b_ih_f"], params["b_hh_f"])
    hs_b = scan_dir(x_tm[::-1], params["w_ih_b"], params["w_hh_b"],
                    params["b_ih_b"], params["b_hh_b"])[::-1]
    out_last = jnp.concatenate([hs_f[-1], hs_b[-1]], axis=-1)    # out[:, -1, :]
    return out_last @ params["fc_w"].T + params["fc_b"]


# ----------------------------------------------------------------------------
# Deterministic parameter init (PyTorch nn.LSTM / nn.Linear shapes)
# ----------------------------------------------------------------------------
def init_params(key, input_size, hidden_size, num_classes):
    keys = jax.random.split(key, 10)
    s = 1.0 / jnp.sqrt(hidden_size)
    u = lambda k, shape: jax.random.uniform(k, shape, jnp.float32, -s, s)
    return {
        "w_ih_f": u(keys[0], (4 * hidden_size, input_size)),
        "w_hh_f": u(keys[1], (4 * hidden_size, hidden_size)),
        "b_ih_f": u(keys[2], (4 * hidden_size,)),
        "b_hh_f": u(keys[3], (4 * hidden_size,)),
        "w_ih_b": u(keys[4], (4 * hidden_size, input_size)),
        "w_hh_b": u(keys[5], (4 * hidden_size, hidden_size)),
        "b_ih_b": u(keys[6], (4 * hidden_size,)),
        "b_hh_b": u(keys[7], (4 * hidden_size,)),
        "fc_w": u(keys[8], (num_classes, 2 * hidden_size)),
        "fc_b": u(keys[9], (num_classes,)),
    }


if __name__ == "__main__":
    B, T = 2, 8
    key = jax.random.PRNGKey(0)
    k_param, k_x = jax.random.split(key)
    params = init_params(k_param, INPUT_SIZE, HIDDEN_SIZE, NUM_CLASSES)
    x = jax.random.normal(k_x, (B, T, INPUT_SIZE), jnp.float32)

    out = bidirectional_lstm_action_recognition(x, params)
    out = jax.block_until_ready(out)

    ref = jax.block_until_ready(_ref_forward(x, params))
    assert out.shape == (B, NUM_CLASSES)
    assert jnp.allclose(out, ref, rtol=1e-4, atol=1e-5), "mismatch vs reference"

    print("KERNEL_OK")
</pallas_src>

<mosaic_0001>
module attributes {stable_mosaic.version = 11 : i64} {
  func.func @_bilstm_fc_kernel(%arg0: memref<16x128xf32, #tpu.memory_space<vmem>>, %arg1: memref<128x1024xf32, #tpu.memory_space<vmem>>, %arg2: memref<128x512xf32, #tpu.memory_space<vmem>>, %arg3: memref<1x1024xf32, #tpu.memory_space<vmem>>, %arg4: memref<256x7xf32, #tpu.memory_space<vmem>>, %arg5: memref<1x7xf32, #tpu.memory_space<vmem>>, %arg6: memref<2x7xf32, #tpu.memory_space<vmem>>, %arg7: memref<16x512xf32, #tpu.memory_space<vmem>>) attributes {dimension_semantics = [], scalar_prefetch = 0 : i64, scratch_operands = 1 : i64, tpu.core_type = #tpu.core_type<tc>} {
    %c0 = arith.constant 0 : index
    %c0_0 = arith.constant 0 : index
    %0 = vector.load %arg0[%c0, %c0_0] : memref<16x128xf32, #tpu.memory_space<vmem>>, vector<16x128xf32>
    %c0_1 = arith.constant 0 : index
    %c0_2 = arith.constant 0 : index
    %1 = vector.load %arg1[%c0_1, %c0_2] : memref<128x1024xf32, #tpu.memory_space<vmem>>, vector<128x1024xf32>
    %cst = arith.constant dense<0.000000e+00> : vector<16x1024xf32>
    %2 = tpu.matmul %0, %1, %cst {dimension_numbers = #tpu.dot_dimension_numbers<[1], [0], [0], [1], [0, 0, 1, 1], [], []>} : vector<16x128xf32>, vector<128x1024xf32>, vector<16x1024xf32> -> vector<16x1024xf32>
    %c0_3 = arith.constant 0 : index
    %c0_4 = arith.constant 0 : index
    %3 = vector.load %arg3[%c0_3, %c0_4] : memref<1x1024xf32, #tpu.memory_space<vmem>>, vector<1x1024xf32>
    %4 = vector.broadcast %3 : vector<1x1024xf32> to vector<16x1024xf32>
    %5 = arith.addf %2, %4 : vector<16x1024xf32>
    %6 = vector.extract_strided_slice %5 {offsets = [0, 0], sizes = [16, 512], strides = [1, 1]} : vector<16x1024xf32> to vector<16x512xf32>
    %c0_5 = arith.constant 0 : index
    %c0_6 = arith.constant 0 : index
    %7 = vector.load %arg7[%c0_5, %c0_6] : memref<16x512xf32, #tpu.memory_space<vmem>>, vector<16x512xf32>
    tpu.vector_store %arg7[%c0_5, %c0_6], %6 {strides = array<i32>} : memref<16x512xf32, #tpu.memory_space<vmem>>, vector<16x512xf32>,
    %8 = vector.extract_strided_slice %5 {offsets = [14, 512], sizes = [2, 512], strides = [1, 1]} : vector<16x1024xf32> to vector<2x512xf32>
    %9 = vector.extract_strided_slice %8 {offsets = [0, 0], sizes = [2, 384], strides = [1, 1]} : vector<2x512xf32> to vector<2x384xf32>
    %10 = arith.negf %9 : vector<2x384xf32>
    %11 = math.exp %10 : vector<2x384xf32>
    %cst_7 = arith.constant 1.000000e+00 : f32
    %12 = vector.broadcast %cst_7 : f32 to vector<2x384xf32>
    %13 = arith.addf %12, %11 : vector<2x384xf32>
    %14 = arith.divf %12, %13 : vector<2x384xf32>
    %15 = vector.extract_strided_slice %8 {offsets = [0, 384], sizes = [2, 128], strides = [1, 1]} : vector<2x512xf32> to vector<2x128xf32>
    %16 = math.tanh %15 : vector<2x128xf32>
    %17 = vector.extract_strided_slice %14 {offsets = [0, 256], sizes = [2, 128], strides = [1, 1]} : vector<2x384xf32> to vector<2x128xf32>
    %18 = vector.extract_strided_slice %14 {offsets = [0, 0], sizes = [2, 128], strides = [1, 1]} : vector<2x384xf32> to vector<2x128xf32>
    %19 = arith.mulf %18, %16 : vector<2x128xf32>
    %20 = math.tanh %19 : vector<2x128xf32>
    %21 = arith.mulf %17, %20 : vector<2x128xf32>
    %c0_8 = arith.constant 0 : index
    %c0_9 = arith.constant 0 : index
    %22 = vector.load %arg2[%c0_8, %c0_9] : memref<128x512xf32, #tpu.memory_space<vmem>>, vector<128x512xf32>
    %cst_10 = arith.constant 0.000000e+00 : f32
    %23 = vector.broadcast %cst_10 : f32 to vector<2x128xf32>
    %cst_11 = arith.constant 0.000000e+00 : f32
    %24 = vector.broadcast %cst_11 : f32 to vector<2x128xf32>
    %c0_i32 = arith.constant 0 : i32
    %c2_i32 = arith.constant 2 : i32
    %25 = arith.muli %c0_i32, %c2_i32 : i32
    %26 = arith.index_cast %25 : i32 to index
    %c0_12 = arith.constant 0 : index
    %27 = vector.load %arg7[%26, %c0_12] : memref<16x512xf32, #tpu.memory_space<vmem>>, vector<2x512xf32>
    %cst_13 = arith.constant dense<0.000000e+00> : vector<2x512xf32>
    %28 = tpu.matmul %23, %22, %cst_13 {dimension_numbers = #tpu.dot_dimension_numbers<[1], [0], [0], [1], [0, 0, 1, 1], [], []>} : vector<2x128xf32>, vector<128x512xf32>, vector<2x512xf32> -> vector<2x512xf32>
    %29 = arith.addf %27, %28 : vector<2x512xf32>
    %30 = vector.extract_strided_slice %29 {offsets = [0, 0], sizes = [2, 384], strides = [1, 1]} : vector<2x512xf32> to vector<2x384xf32>
    %31 = arith.negf %30 : vector<2x384xf32>
    %32 = math.exp %31 : vector<2x384xf32>
    %cst_14 = arith.constant 1.000000e+00 : f32
    %33 = vector.broadcast %cst_14 : f32 to vector<2x384xf32>
    %34 = arith.addf %33, %32 : vector<2x384xf32>
    %35 = arith.divf %33, %34 : vector<2x384xf32>
    %36 = vector.extract_strided_slice %29 {offsets = [0, 384], sizes = [2, 128], strides = [1, 1]} : vector<2x512xf32> to vector<2x128xf32>
    %37 = math.tanh %36 : vector<2x128xf32>
    %38 = vector.extract_strided_slice %35 {offsets = [0, 0], sizes = [2, 128], strides = [1, 1]} : vector<2x384xf32> to vector<2x128xf32>
    %39 = vector.extract_strided_slice %35 {offsets = [0, 128], sizes = [2, 128], strides = [1, 1]} : vector<2x384xf32> to vector<2x128xf32>
    %40 = vector.extract_strided_slice %35 {offsets = [0, 256], sizes = [2, 128], strides = [1, 1]} : vector<2x384xf32> to vector<2x128xf32>
    %41 = arith.mulf %39, %24 : vector<2x128xf32>
    %42 = arith.mulf %38, %37 : vector<2x128xf32>
    %43 = arith.addf %41, %42 : vector<2x128xf32>
    %44 = math.tanh %43 : vector<2x128xf32>
    %45 = arith.mulf %40, %44 : vector<2x128xf32>
    %c1_i32 = arith.constant 1 : i32
    %c2_i32_15 = arith.constant 2 : i32
    %46 = arith.muli %c1_i32, %c2_i32_15 : i32
    %47 = arith.index_cast %46 : i32 to index
    %c0_16 = arith.constant 0 : index
    %48 = vector.load %arg7[%47, %c0_16] : memref<16x512xf32, #tpu.memory_space<vmem>>, vector<2x512xf32>
    %cst_17 = arith.constant dense<0.000000e+00> : vector<2x512xf32>
    %49 = tpu.matmul %45, %22, %cst_17 {dimension_numbers = #tpu.dot_dimension_numbers<[1], [0], [0], [1], [0, 0, 1, 1], [], []>} : vector<2x128xf32>, vector<128x512xf32>, vector<2x512xf32> -> vector<2x512xf32>
    %50 = arith.addf %48, %49 : vector<2x512xf32>
    %51 = vector.extract_strided_slice %50 {offsets = [0, 0], sizes = [2, 384], strides = [1, 1]} : vector<2x512xf32> to vector<2x384xf32>
    %52 = arith.negf %51 : vector<2x384xf32>
    %53 = math.exp %52 : vector<2x384xf32>
    %cst_18 = arith.constant 1.000000e+00 : f32
    %54 = vector.broadcast %cst_18 : f32 to vector<2x384xf32>
    %55 = arith.addf %54, %53 : vector<2x384xf32>
    %56 = arith.divf %54, %55 : vector<2x384xf32>
    %57 = vector.extract_strided_slice %50 {offsets = [0, 384], sizes = [2, 128], strides = [1, 1]} : vector<2x512xf32> to vector<2x128xf32>
    %58 = math.tanh %57 : vector<2x128xf32>
    %59 = vector.extract_strided_slice %56 {offsets = [0, 0], sizes = [2, 128], strides = [1, 1]} : vector<2x384xf32> to vector<2x128xf32>
    %60 = vector.extract_strided_slice %56 {offsets = [0, 128], sizes = [2, 128], strides = [1, 1]} : vector<2x384xf32> to vector<2x128xf32>
    %61 = vector.extract_strided_slice %56 {offsets = [0, 256], sizes = [2, 128], strides = [1, 1]} : vector<2x384xf32> to vector<2x128xf32>
    %62 = arith.mulf %60, %43 : vector<2x128xf32>
    %63 = arith.mulf %59, %58 : vector<2x128xf32>
    %64 = arith.addf %62, %63 : vector<2x128xf32>
    %65 = math.tanh %64 : vector<2x128xf32>
    %66 = arith.mulf %61, %65 : vector<2x128xf32>
    %c2_i32_19 = arith.constant 2 : i32
    %c2_i32_20 = arith.constant 2 : i32
    %67 = arith.muli %c2_i32_19, %c2_i32_20 : i32
    %68 = arith.index_cast %67 : i32 to index
    %c0_21 = arith.constant 0 : index
    %69 = vector.load %arg7[%68, %c0_21] : memref<16x512xf32, #tpu.memory_space<vmem>>, vector<2x512xf32>
    %cst_22 = arith.constant dense<0.000000e+00> : vector<2x512xf32>
    %70 = tpu.matmul %66, %22, %cst_22 {dimension_numbers = #tpu.dot_dimension_numbers<[1], [0], [0], [1], [0, 0, 1, 1], [], []>} : vector<2x128xf32>, vector<128x512xf32>, vector<2x512xf32> -> vector<2x512xf32>
    %71 = arith.addf %69, %70 : vector<2x512xf32>
    %72 = vector.extract_strided_slice %71 {offsets = [0, 0], sizes = [2, 384], strides = [1, 1]} : vector<2x512xf32> to vector<2x384xf32>
    %73 = arith.negf %72 : vector<2x384xf32>
    %74 = math.exp %73 : vector<2x384xf32>
    %cst_23 = arith.constant 1.000000e+00 : f32
    %75 = vector.broadcast %cst_23 : f32 to vector<2x384xf32>
    %76 = arith.addf %75, %74 : vector<2x384xf32>
    %77 = arith.divf %75, %76 : vector<2x384xf32>
    %78 = vector.extract_strided_slice %71 {offsets = [0, 384], sizes = [2, 128], strides = [1, 1]} : vector<2x512xf32> to vector<2x128xf32>
    %79 = math.tanh %78 : vector<2x128xf32>
    %80 = vector.extract_strided_slice %77 {offsets = [0, 0], sizes = [2, 128], strides = [1, 1]} : vector<2x384xf32> to vector<2x128xf32>
    %81 = vector.extract_strided_slice %77 {offsets = [0, 128], sizes = [2, 128], strides = [1, 1]} : vector<2x384xf32> to vector<2x128xf32>
    %82 = vector.extract_strided_slice %77 {offsets = [0, 256], sizes = [2, 128], strides = [1, 1]} : vector<2x384xf32> to vector<2x128xf32>
    %83 = arith.mulf %81, %64 : vector<2x128xf32>
    %84 = arith.mulf %80, %79 : vector<2x128xf32>
    %85 = arith.addf %83, %84 : vector<2x128xf32>
    %86 = math.tanh %85 : vector<2x128xf32>
    %87 = arith.mulf %82, %86 : vector<2x128xf32>
    %c3_i32 = arith.constant 3 : i32
    %c2_i32_24 = arith.constant 2 : i32
    %88 = arith.muli %c3_i32, %c2_i32_24 : i32
    %89 = arith.index_cast %88 : i32 to index
    %c0_25 = arith.constant 0 : index
    %90 = vector.load %arg7[%89, %c0_25] : memref<16x512xf32, #tpu.memory_space<vmem>>, vector<2x512xf32>
    %cst_26 = arith.constant dense<0.000000e+00> : vector<2x512xf32>
    %91 = tpu.matmul %87, %22, %cst_26 {dimension_numbers = #tpu.dot_dimension_numbers<[1], [0], [0], [1], [0, 0, 1, 1], [], []>} : vector<2x128xf32>, vector<128x512xf32>, vector<2x512xf32> -> vector<2x512xf32>
    %92 = arith.addf %90, %91 : vector<2x512xf32>
    %93 = vector.extract_strided_slice %92 {offsets = [0, 0], sizes = [2, 384], strides = [1, 1]} : vector<2x512xf32> to vector<2x384xf32>
    %94 = arith.negf %93 : vector<2x384xf32>
    %95 = math.exp %94 : vector<2x384xf32>
    %cst_27 = arith.constant 1.000000e+00 : f32
    %96 = vector.broadcast %cst_27 : f32 to vector<2x384xf32>
    %97 = arith.addf %96, %95 : vector<2x384xf32>
    %98 = arith.divf %96, %97 : vector<2x384xf32>
    %99 = vector.extract_strided_slice %92 {offsets = [0, 384], sizes = [2, 128], strides = [1, 1]} : vector<2x512xf32> to vector<2x128xf32>
    %100 = math.tanh %99 : vector<2x128xf32>
    %101 = vector.extract_strided_slice %98 {offsets = [0, 0], sizes = [2, 128], strides = [1, 1]} : vector<2x384xf32> to vector<2x128xf32>
    %102 = vector.extract_strided_slice %98 {offsets = [0, 128], sizes = [2, 128], strides = [1, 1]} : vector<2x384xf32> to vector<2x128xf32>
    %103 = vector.extract_strided_slice %98 {offsets = [0, 256], sizes = [2, 128], strides = [1, 1]} : vector<2x384xf32> to vector<2x128xf32>
    %104 = arith.mulf %102, %85 : vector<2x128xf32>
    %105 = arith.mulf %101, %100 : vector<2x128xf32>
    %106 = arith.addf %104, %105 : vector<2x128xf32>
    %107 = math.tanh %106 : vector<2x128xf32>
    %108 = arith.mulf %103, %107 : vector<2x128xf32>
    %c4_i32 = arith.constant 4 : i32
    %c2_i32_28 = arith.constant 2 : i32
    %109 = arith.muli %c4_i32, %c2_i32_28 : i32
    %110 = arith.index_cast %109 : i32 to index
    %c0_29 = arith.constant 0 : index
    %111 = vector.load %arg7[%110, %c0_29] : memref<16x512xf32, #tpu.memory_space<vmem>>, vector<2x512xf32>
    %cst_30 = arith.constant dense<0.000000e+00> : vector<2x512xf32>
    %112 = tpu.matmul %108, %22, %cst_30 {dimension_numbers = #tpu.dot_dimension_numbers<[1], [0], [0], [1], [0, 0, 1, 1], [], []>} : vector<2x128xf32>, vector<128x512xf32>, vector<2x512xf32> -> vector<2x512xf32>
    %113 = arith.addf %111, %112 : vector<2x512xf32>
    %114 = vector.extract_strided_slice %113 {offsets = [0, 0], sizes = [2, 384], strides = [1, 1]} : vector<2x512xf32> to vector<2x384xf32>
    %115 = arith.negf %114 : vector<2x384xf32>
    %116 = math.exp %115 : vector<2x384xf32>
    %cst_31 = arith.constant 1.000000e+00 : f32
    %117 = vector.broadcast %cst_31 : f32 to vector<2x384xf32>
    %118 = arith.addf %117, %116 : vector<2x384xf32>
    %119 = arith.divf %117, %118 : vector<2x384xf32>
    %120 = vector.extract_strided_slice %113 {offsets = [0, 384], sizes = [2, 128], strides = [1, 1]} : vector<2x512xf32> to vector<2x128xf32>
    %121 = math.tanh %120 : vector<2x128xf32>
    %122 = vector.extract_strided_slice %119 {offsets = [0, 0], sizes = [2, 128], strides = [1, 1]} : vector<2x384xf32> to vector<2x128xf32>
    %123 = vector.extract_strided_slice %119 {offsets = [0, 128], sizes = [2, 128], strides = [1, 1]} : vector<2x384xf32> to vector<2x128xf32>
    %124 = vector.extract_strided_slice %119 {offsets = [0, 256], sizes = [2, 128], strides = [1, 1]} : vector<2x384xf32> to vector<2x128xf32>
    %125 = arith.mulf %123, %106 : vector<2x128xf32>
    %126 = arith.mulf %122, %121 : vector<2x128xf32>
    %127 = arith.addf %125, %126 : vector<2x128xf32>
    %128 = math.tanh %127 : vector<2x128xf32>
    %129 = arith.mulf %124, %128 : vector<2x128xf32>
    %c5_i32 = arith.constant 5 : i32
    %c2_i32_32 = arith.constant 2 : i32
    %130 = arith.muli %c5_i32, %c2_i32_32 : i32
    %131 = arith.index_cast %130 : i32 to index
    %c0_33 = arith.constant 0 : index
    %132 = vector.load %arg7[%131, %c0_33] : memref<16x512xf32, #tpu.memory_space<vmem>>, vector<2x512xf32>
    %cst_34 = arith.constant dense<0.000000e+00> : vector<2x512xf32>
    %133 = tpu.matmul %129, %22, %cst_34 {dimension_numbers = #tpu.dot_dimension_numbers<[1], [0], [0], [1], [0, 0, 1, 1], [], []>} : vector<2x128xf32>, vector<128x512xf32>, vector<2x512xf32> -> vector<2x512xf32>
    %134 = arith.addf %132, %133 : vector<2x512xf32>
    %135 = vector.extract_strided_slice %134 {offsets = [0, 0], sizes = [2, 384], strides = [1, 1]} : vector<2x512xf32> to vector<2x384xf32>
    %136 = arith.negf %135 : vector<2x384xf32>
    %137 = math.exp %136 : vector<2x384xf32>
    %cst_35 = arith.constant 1.000000e+00 : f32
    %138 = vector.broadcast %cst_35 : f32 to vector<2x384xf32>
    %139 = arith.addf %138, %137 : vector<2x384xf32>
    %140 = arith.divf %138, %139 : vector<2x384xf32>
    %141 = vector.extract_strided_slice %134 {offsets = [0, 384], sizes = [2, 128], strides = [1, 1]} : vector<2x512xf32> to vector<2x128xf32>
    %142 = math.tanh %141 : vector<2x128xf32>
    %143 = vector.extract_strided_slice %140 {offsets = [0, 0], sizes = [2, 128], strides = [1, 1]} : vector<2x384xf32> to vector<2x128xf32>
    %144 = vector.extract_strided_slice %140 {offsets = [0, 128], sizes = [2, 128], strides = [1, 1]} : vector<2x384xf32> to vector<2x128xf32>
    %145 = vector.extract_strided_slice %140 {offsets = [0, 256], sizes = [2, 128], strides = [1, 1]} : vector<2x384xf32> to vector<2x128xf32>
    %146 = arith.mulf %144, %127 : vector<2x128xf32>
    %147 = arith.mulf %143, %142 : vector<2x128xf32>
    %148 = arith.addf %146, %147 : vector<2x128xf32>
    %149 = math.tanh %148 : vector<2x128xf32>
    %150 = arith.mulf %145, %149 : vector<2x128xf32>
    %c6_i32 = arith.constant 6 : i32
    %c2_i32_36 = arith.constant 2 : i32
    %151 = arith.muli %c6_i32, %c2_i32_36 : i32
    %152 = arith.index_cast %151 : i32 to index
    %c0_37 = arith.constant 0 : index
    %153 = vector.load %arg7[%152, %c0_37] : memref<16x512xf32, #tpu.memory_space<vmem>>, vector<2x512xf32>
    %cst_38 = arith.constant dense<0.000000e+00> : vector<2x512xf32>
    %154 = tpu.matmul %150, %22, %cst_38 {dimension_numbers = #tpu.dot_dimension_numbers<[1], [0], [0], [1], [0, 0, 1, 1], [], []>} : vector<2x128xf32>, vector<128x512xf32>, vector<2x512xf32> -> vector<2x512xf32>
    %155 = arith.addf %153, %154 : vector<2x512xf32>
    %156 = vector.extract_strided_slice %155 {offsets = [0, 0], sizes = [2, 384], strides = [1, 1]} : vector<2x512xf32> to vector<2x384xf32>
    %157 = arith.negf %156 : vector<2x384xf32>
    %158 = math.exp %157 : vector<2x384xf32>
    %cst_39 = arith.constant 1.000000e+00 : f32
    %159 = vector.broadcast %cst_39 : f32 to vector<2x384xf32>
    %160 = arith.addf %159, %158 : vector<2x384xf32>
    %161 = arith.divf %159, %160 : vector<2x384xf32>
    %162 = vector.extract_strided_slice %155 {offsets = [0, 384], sizes = [2, 128], strides = [1, 1]} : vector<2x512xf32> to vector<2x128xf32>
    %163 = math.tanh %162 : vector<2x128xf32>
    %164 = vector.extract_strided_slice %161 {offsets = [0, 0], sizes = [2, 128], strides = [1, 1]} : vector<2x384xf32> to vector<2x128xf32>
    %165 = vector.extract_strided_slice %161 {offsets = [0, 128], sizes = [2, 128], strides = [1, 1]} : vector<2x384xf32> to vector<2x128xf32>
    %166 = vector.extract_strided_slice %161 {offsets = [0, 256], sizes = [2, 128], strides = [1, 1]} : vector<2x384xf32> to vector<2x128xf32>
    %167 = arith.mulf %165, %148 : vector<2x128xf32>
    %168 = arith.mulf %164, %163 : vector<2x128xf32>
    %169 = arith.addf %167, %168 : vector<2x128xf32>
    %170 = math.tanh %169 : vector<2x128xf32>
    %171 = arith.mulf %166, %170 : vector<2x128xf32>
    %c7_i32 = arith.constant 7 : i32
    %c2_i32_40 = arith.constant 2 : i32
    %172 = arith.muli %c7_i32, %c2_i32_40 : i32
    %173 = arith.index_cast %172 : i32 to index
    %c0_41 = arith.constant 0 : index
    %174 = vector.load %arg7[%173, %c0_41] : memref<16x512xf32, #tpu.memory_space<vmem>>, vector<2x512xf32>
    %cst_42 = arith.constant dense<0.000000e+00> : vector<2x512xf32>
    %175 = tpu.matmul %171, %22, %cst_42 {dimension_numbers = #tpu.dot_dimension_numbers<[1], [0], [0], [1], [0, 0, 1, 1], [], []>} : vector<2x128xf32>, vector<128x512xf32>, vector<2x512xf32> -> vector<2x512xf32>
    %176 = arith.addf %174, %175 : vector<2x512xf32>
    %177 = vector.extract_strided_slice %176 {offsets = [0, 0], sizes = [2, 384], strides = [1, 1]} : vector<2x512xf32> to vector<2x384xf32>
    %178 = arith.negf %177 : vector<2x384xf32>
    %179 = math.exp %178 : vector<2x384xf32>
    %cst_43 = arith.constant 1.000000e+00 : f32
    %180 = vector.broadcast %cst_43 : f32 to vector<2x384xf32>
    %181 = arith.addf %180, %179 : vector<2x384xf32>
    %182 = arith.divf %180, %181 : vector<2x384xf32>
    %183 = vector.extract_strided_slice %176 {offsets = [0, 384], sizes = [2, 128], strides = [1, 1]} : vector<2x512xf32> to vector<2x128xf32>
    %184 = math.tanh %183 : vector<2x128xf32>
    %185 = vector.extract_strided_slice %182 {offsets = [0, 0], sizes = [2, 128], strides = [1, 1]} : vector<2x384xf32> to vector<2x128xf32>
    %186 = vector.extract_strided_slice %182 {offsets = [0, 128], sizes = [2, 128], strides = [1, 1]} : vector<2x384xf32> to vector<2x128xf32>
    %187 = vector.extract_strided_slice %182 {offsets = [0, 256], sizes = [2, 128], strides = [1, 1]} : vector<2x384xf32> to vector<2x128xf32>
    %188 = arith.mulf %186, %169 : vector<2x128xf32>
    %189 = arith.mulf %185, %184 : vector<2x128xf32>
    %190 = arith.addf %188, %189 : vector<2x128xf32>
    %191 = math.tanh %190 : vector<2x128xf32>
    %192 = arith.mulf %187, %191 : vector<2x128xf32>
    %c8_i32 = arith.constant 8 : i32
    %c0_44 = arith.constant 0 : index
    %c0_45 = arith.constant 0 : index
    %193 = vector.load %arg4[%c0_44, %c0_45] : memref<256x7xf32, #tpu.memory_space<vmem>>, vector<128x7xf32>
    %cst_46 = arith.constant dense<0.000000e+00> : vector<2x7xf32>
    %194 = tpu.matmul %192, %193, %cst_46 {dimension_numbers = #tpu.dot_dimension_numbers<[1], [0], [0], [1], [0, 0, 1, 1], [], []>} : vector<2x128xf32>, vector<128x7xf32>, vector<2x7xf32> -> vector<2x7xf32>
    %c128 = arith.constant 128 : index
    %c0_47 = arith.constant 0 : index
    %195 = vector.load %arg4[%c128, %c0_47] : memref<256x7xf32, #tpu.memory_space<vmem>>, vector<128x7xf32>
    %cst_48 = arith.constant dense<0.000000e+00> : vector<2x7xf32>
    %196 = tpu.matmul %21, %195, %cst_48 {dimension_numbers = #tpu.dot_dimension_numbers<[1], [0], [0], [1], [0, 0, 1, 1], [], []>} : vector<2x128xf32>, vector<128x7xf32>, vector<2x7xf32> -> vector<2x7xf32>
    %197 = arith.addf %194, %196 : vector<2x7xf32>
    %c0_49 = arith.constant 0 : index
    %c0_50 = arith.constant 0 : index
    %198 = vector.load %arg5[%c0_49, %c0_50] : memref<1x7xf32, #tpu.memory_space<vmem>>, vector<1x7xf32>
    %199 = vector.broadcast %198 : vector<1x7xf32> to vector<2x7xf32>
    %200 = arith.addf %197, %199 : vector<2x7xf32>
    %c0_51 = arith.constant 0 : index
    %c0_52 = arith.constant 0 : index
    %201 = vector.load %arg6[%c0_51, %c0_52] : memref<2x7xf32, #tpu.memory_space<vmem>>, vector<2x7xf32>
    tpu.vector_store %arg6[%c0_51, %c0_52], %200 {strides = array<i32>} : memref<2x7xf32, #tpu.memory_space<vmem>>, vector<2x7xf32>,
    return
  }
}

</mosaic_0001>

<llo_original>
// kernel: bidirectional_lstm_action_recognition.1
$region0: #{bidirectional_lstm_action_recognition.1}
  #allocation0 [shape = 'u32[]', space=smem, size = 0x4, offset = 0x4, fixed_abs, tag = 'smem constant byte address 0x4 - core index']
  #allocation1 [shape = 'u32[72,128]{1,0:T(1,128)}', space=vmem, size = 0x9000, scoped, tag = 'internal scratch']
  #allocation2 [shape = 'f32[16,512]{1,0:T(8,128)}', space=vmem, size = 0x8000, scoped, tag = 'scratch operand']
  %s0 = inlined_call_operand.vmem [shape: f32[16,128], index: 0, kind: input, shape index: {}]
  %s1 = inlined_call_operand.vmem [shape: f32[128,1024], index: 1, kind: input, shape index: {}]
  %s2 = inlined_call_operand.vmem [shape: f32[128,512], index: 2, kind: input, shape index: {}]
  %s3 = inlined_call_operand.vmem [shape: f32[1,1024], index: 3, kind: input, shape index: {}]
  %s4 = inlined_call_operand.vmem [shape: f32[256,7], index: 4, kind: input, shape index: {}]
  %s5 = inlined_call_operand.vmem [shape: f32[1,7], index: 5, kind: input, shape index: {}]
  %s6 = inlined_call_operand.hbm [shape: f32[2,7], index: 6, kind: output, shape index: {}]
  %s7 = sld [smem:[#allocation0]]
  $region34: #{bidirectional_lstm_action_recognition.1} parent=0
    _
  %s9 = ssub.s32 1, %s7
  %s10 = scalar_select 0, %s9, %s7
  $region1: #{bidirectional_lstm_action_recognition.1} parent=0
    #allocation3 [shape = 'u8[1024]{0}', space=vmem, size = 0x400, scoped, tag = 'output window, operand 0, single buffered']
    #allocation4 [shape = 's32[1]{0}', space=sflag, size = 0x4, scoped, tag = 'scoped memory for bidirectional_lstm_action_recognition.1']
    %11 = vsyncpa [#allocation4], 0
    // Predicated region
    $region2: #{bidirectional_lstm_action_recognition.1} parent=1 // pred_check
      _
    $region3: #{bidirectional_lstm_action_recognition.1} parent=1 // pred_check_branch
      %13 = sbr.rel (0) target = $region5
    $region4: #{bidirectional_lstm_action_recognition.1} parent=1 // pred_region
      _
    $region5: #{bidirectional_lstm_action_recognition.1} parent=1 // pred_fallthru
      _
    // Predicated region
    $region6: #{bidirectional_lstm_action_recognition.1} parent=1 // pred_check
      _
    $region7: #{bidirectional_lstm_action_recognition.1} parent=1 // pred_check_branch
      %15 = sbr.rel (0) target = $region9
    $region8: #{bidirectional_lstm_action_recognition.1} parent=1 // pred_region
      _
    $region9: #{bidirectional_lstm_action_recognition.1} parent=1 // pred_fallthru
      _
    // Predicated region
    $region10: #{bidirectional_lstm_action_recognition.1} parent=1 // pred_check
      _
    $region11: #{bidirectional_lstm_action_recognition.1} parent=1 // pred_check_branch
      %17 = sbr.rel (0) target = $region13
    $region12: #{bidirectional_lstm_action_recognition.1} parent=1 // pred_region
      _
    $region13: #{bidirectional_lstm_action_recognition.1} parent=1 // pred_fallthru
      _
    // Predicated region
    $region14: #{bidirectional_lstm_action_recognition.1} parent=1 // pred_check
      _
    $region15: #{bidirectional_lstm_action_recognition.1} parent=1 // pred_check_branch
      %19 = sbr.rel (0) target = $region17
    $region16: #{bidirectional_lstm_action_recognition.1} parent=1 // pred_region
      _
    $region17: #{bidirectional_lstm_action_recognition.1} parent=1 // pred_fallthru
      _
    // Predicated region
    $region18: #{bidirectional_lstm_action_recognition.1} parent=1 // pred_check
      _
    $region19: #{bidirectional_lstm_action_recognition.1} parent=1 // pred_check_branch
      %21 = sbr.rel (0) target = $region21
    $region20: #{bidirectional_lstm_action_recognition.1} parent=1 // pred_region
      _
    $region21: #{bidirectional_lstm_action_recognition.1} parent=1 // pred_fallthru
      _
    // Predicated region
    $region22: #{bidirectional_lstm_action_recognition.1} parent=1 // pred_check
      _
    $region23: #{bidirectional_lstm_action_recognition.1} parent=1 // pred_check_branch
      %23 = sbr.rel (0) target = $region25
    $region24: #{bidirectional_lstm_action_recognition.1} parent=1 // pred_region
      _
    $region25: #{bidirectional_lstm_action_recognition.1} parent=1 // pred_fallthru
      _
    %v24 = vld [vmem:[%s0] sm:$0xff]
    %v25 = vld [vmem:[%s0 + $0x8] sm:$0xff]
    %v26 = vld [vmem:[%s1] sm:$0xff]
    %v27 = vld [vmem:[%s1 + $0x8] sm:$0xff]
    %v28 = vld [vmem:[%s1 + $0x10] sm:$0xff]
    %v29 = vld [vmem:[%s1 + $0x18] sm:$0xff]
    %v30 = vld [vmem:[%s1 + $0x20] sm:$0xff]
    %v31 = vld [vmem:[%s1 + $0x30] sm:$0xff]
    %v32 = vld [vmem:[%s1 + $0x38] sm:$0xff]
    %v33 = vld [vmem:[%s1 + $0x40] sm:$0xff]
    %v34 = vld [vmem:[%s1 + $0x48] sm:$0xff]
    %v35 = vld [vmem:[%s1 + $0x50] sm:$0xff]
    %v36 = vld [vmem:[%s1 + $0x58] sm:$0xff]
    %v37 = vld [vmem:[%s1 + $0x60] sm:$0xff]
    %v38 = vld [vmem:[%s1 + $0x70] sm:$0xff]
    %v39 = vld [vmem:[%s1 + $0x78] sm:$0xff]
    %v40 = vld [vmem:[%s1 + $0x80] sm:$0xff]
    %v41 = vld [vmem:[%s1 + $0x88] sm:$0xff]
    %v42 = vld [vmem:[%s1 + $0x90] sm:$0xff]
    %v43 = vld [vmem:[%s1 + $0x98] sm:$0xff]
    %v44 = vld [vmem:[%s1 + $0xa0] sm:$0xff]
    %v45 = vld [vmem:[%s1 + $0xb0] sm:$0xff]
    %v46 = vld [vmem:[%s1 + $0xb8] sm:$0xff]
    %v47 = vld [vmem:[%s1 + $0xc0] sm:$0xff]
    %v48 = vld [vmem:[%s1 + $0xc8] sm:$0xff]
    %v49 = vld [vmem:[%s1 + $0xd0] sm:$0xff]
    %v50 = vld [vmem:[%s1 + $0xd8] sm:$0xff]
    %v51 = vld [vmem:[%s1 + $0xe0] sm:$0xff]
    %v52 = vld [vmem:[%s1 + $0xf0] sm:$0xff]
    %v53 = vld [vmem:[%s1 + $0xf8] sm:$0xff]
    %v54 = vld [vmem:[%s1 + $0x100] sm:$0xff]
    %v55 = vld [vmem:[%s1 + $0x108] sm:$0xff]
    %v56 = vld [vmem:[%s1 + $0x110] sm:$0xff]
    %v57 = vld [vmem:[%s1 + $0x118] sm:$0xff]
    %v58 = vld [vmem:[%s1 + $0x120] sm:$0xff]
    %v59 = vld [vmem:[%s1 + $0x130] sm:$0xff]
    %v60 = vld [vmem:[%s1 + $0x138] sm:$0xff]
    %v61 = vld [vmem:[%s1 + $0x140] sm:$0xff]
    %v62 = vld [vmem:[%s1 + $0x148] sm:$0xff]
    %v63 = vld [vmem:[%s1 + $0x150] sm:$0xff]
    %v64 = vld [vmem:[%s1 + $0x158] sm:$0xff]
    %v65 = vld [vmem:[%s1 + $0x160] sm:$0xff]
    %v66 = vld [vmem:[%s1 + $0x170] sm:$0xff]
    %v67 = vld [vmem:[%s1 + $0x178] sm:$0xff]
    %v68 = vld [vmem:[%s1 + $0x180] sm:$0xff]
    %v69 = vld [vmem:[%s1 + $0x188] sm:$0xff]
    %v70 = vld [vmem:[%s1 + $0x190] sm:$0xff]
    %v71 = vld [vmem:[%s1 + $0x198] sm:$0xff]
    %v72 = vld [vmem:[%s1 + $0x1a0] sm:$0xff]
    %v73 = vld [vmem:[%s1 + $0x1b0] sm:$0xff]
    %v74 = vld [vmem:[%s1 + $0x1b8] sm:$0xff]
    %v75 = vld [vmem:[%s1 + $0x1c0] sm:$0xff]
    %v76 = vld [vmem:[%s1 + $0x1c8] sm:$0xff]
    %v77 = vld [vmem:[%s1 + $0x1d0] sm:$0xff]
    %v78 = vld [vmem:[%s1 + $0x1d8] sm:$0xff]
    %v79 = vld [vmem:[%s1 + $0x1e0] sm:$0xff]
    %v80 = vld [vmem:[%s1 + $0x1f0] sm:$0xff]
    %v81 = vld [vmem:[%s1 + $0x1f8] sm:$0xff]
    %v82 = vld [vmem:[%s1 + $0x200] sm:$0xff]
    %v83 = vld [vmem:[%s1 + $0x208] sm:$0xff]
    %v84 = vld [vmem:[%s1 + $0x210] sm:$0xff]
    %v85 = vld [vmem:[%s1 + $0x218] sm:$0xff]
    %v86 = vld [vmem:[%s1 + $0x220] sm:$0xff]
    %v87 = vld [vmem:[%s1 + $0x230] sm:$0xff]
    %v88 = vld [vmem:[%s1 + $0x238] sm:$0xff]
    %v89 = vld [vmem:[%s1 + $0x240] sm:$0xff]
    %v90 = vld [vmem:[%s1 + $0x248] sm:$0xff]
    %v91 = vld [vmem:[%s1 + $0x250] sm:$0xff]
    %v92 = vld [vmem:[%s1 + $0x258] sm:$0xff]
    %v93 = vld [vmem:[%s1 + $0x260] sm:$0xff]
    %v94 = vld [vmem:[%s1 + $0x270] sm:$0xff]
    %v95 = vld [vmem:[%s1 + $0x278] sm:$0xff]
    %v96 = vld [vmem:[%s1 + $0x280] sm:$0xff]
    %v97 = vld [vmem:[%s1 + $0x288] sm:$0xff]
    %v98 = vld [vmem:[%s1 + $0x290] sm:$0xff]
    %v99 = vld [vmem:[%s1 + $0x298] sm:$0xff]
    %v100 = vld [vmem:[%s1 + $0x2a0] sm:$0xff]
    %v101 = vld [vmem:[%s1 + $0x2b0] sm:$0xff]
    %v102 = vld [vmem:[%s1 + $0x2b8] sm:$0xff]
    %v103 = vld [vmem:[%s1 + $0x2c0] sm:$0xff]
    %v104 = vld [vmem:[%s1 + $0x2c8] sm:$0xff]
    %v105 = vld [vmem:[%s1 + $0x2d0] sm:$0xff]
    %v106 = vld [vmem:[%s1 + $0x2d8] sm:$0xff]
    %v107 = vld [vmem:[%s1 + $0x2e0] sm:$0xff]
    %v108 = vld [vmem:[%s1 + $0x2f0] sm:$0xff]
    %v109 = vld [vmem:[%s1 + $0x2f8] sm:$0xff]
    %v110 = vld [vmem:[%s1 + $0x300] sm:$0xff]
    %v111 = vld [vmem:[%s1 + $0x308] sm:$0xff]
    %v112 = vld [vmem:[%s1 + $0x310] sm:$0xff]
    %v113 = vld [vmem:[%s1 + $0x318] sm:$0xff]
    %v114 = vld [vmem:[%s1 + $0x320] sm:$0xff]
    %v115 = vld [vmem:[%s1 + $0x330] sm:$0xff]
    %v116 = vld [vmem:[%s1 + $0x338] sm:$0xff]
    %v117 = vld [vmem:[%s1 + $0x340] sm:$0xff]
    %v118 = vld [vmem:[%s1 + $0x348] sm:$0xff]
    %v119 = vld [vmem:[%s1 + $0x350] sm:$0xff]
    %v120 = vld [vmem:[%s1 + $0x358] sm:$0xff]
    %v121 = vld [vmem:[%s1 + $0x360] sm:$0xff]
    %v122 = vld [vmem:[%s1 + $0x370] sm:$0xff]
    %v123 = vld [vmem:[%s1 + $0x378] sm:$0xff]
    %v124 = vld [vmem:[%s1 + $0x380] sm:$0xff]
    %v125 = vld [vmem:[%s1 + $0x388] sm:$0xff]
    %v126 = vld [vmem:[%s1 + $0x390] sm:$0xff]
    %v127 = vld [vmem:[%s1 + $0x398] sm:$0xff]
    %v128 = vld [vmem:[%s1 + $0x3a0] sm:$0xff]
    %v129 = vld [vmem:[%s1 + $0x3b0] sm:$0xff]
    %v130 = vld [vmem:[%s1 + $0x3b8] sm:$0xff]
    %v131 = vld [vmem:[%s1 + $0x3c0] sm:$0xff]
    %v132 = vld [vmem:[%s1 + $0x3c8] sm:$0xff]
    %v133 = vld [vmem:[%s1 + $0x3d0] sm:$0xff]
    %v134 = vld [vmem:[%s1 + $0x3d8] sm:$0xff]
    %v135 = vld [vmem:[%s1 + $0x3e0] sm:$0xff]
    %v136 = vld [vmem:[%s1 + $0x3f0] sm:$0xff]
    %v137 = vld [vmem:[%s1 + $0x3f8] sm:$0xff]
    %v138 = vld [vmem:[%s3] sm:$0xff]
    %v140 = vperm.slane %v138, 0
    %v141 = vperm.slane %v138, 1
    %v142 = vperm.slane %v138, 2
    %v143 = vperm.slane %v138, 3
    %v144 = vperm.slane %v138, 4
    %v145 = vperm.slane %v138, 6
    %v146 = vperm.slane %v138, 7
    %154 = vmatpush.msra.mxu0 %v131
    %155 = vmatpush.msra.mxu0 %v124
    %156 = vmatpush.msra.mxu0 %v117
    %157 = vmatpush.msra.mxu0 %v110
    %158 = vmatpush.msra.mxu0 %v103
    %159 = vmatpush.msra.mxu0 %v96
    %160 = vmatpush.msra.mxu0 %v89
    %161 = vmatpush.msra.mxu0 %v82
    %162 = vmatpush.msra.mxu0 %v75
    %163 = vmatpush.msra.mxu0 %v68
    %164 = vmatpush.msra.mxu0 %v61
    %165 = vmatpush.msra.mxu0 %v54
    %166 = vmatpush.msra.mxu0 %v47
    %167 = vmatpush.msra.mxu0 %v40
    %168 = vmatpush.msra.mxu0 %v33
    %169 = vmatpush.msra.mxu0 %v26
    %170 = vmatmul.f32.gmra.mxu0 %v24
    %v171 = vpop.f32.mrf.mxu0
    %v172 = vadd.f32 %v140, %v171
    %173 = vmatmul.f32.gmra.mxu0 %v25
    %v174 = vpop.f32.mrf.mxu0
    %v175 = vadd.f32 %v140, %v174
    %176 = vdwg.mxu0
    %177 = vmatpush.msra.mxu0 %v132
    %178 = vmatpush.msra.mxu0 %v125
    %179 = vmatpush.msra.mxu0 %v118
    %180 = vmatpush.msra.mxu0 %v111
    %181 = vmatpush.msra.mxu0 %v104
    %182 = vmatpush.msra.mxu0 %v97
    %183 = vmatpush.msra.mxu0 %v90
    %184 = vmatpush.msra.mxu0 %v83
    %185 = vmatpush.msra.mxu0 %v76
    %186 = vmatpush.msra.mxu0 %v69
    %187 = vmatpush.msra.mxu0 %v62
    %188 = vmatpush.msra.mxu0 %v55
    %189 = vmatpush.msra.mxu0 %v48
    %190 = vmatpush.msra.mxu0 %v41
    %191 = vmatpush.msra.mxu0 %v34
    %192 = vmatpush.msra.mxu0 %v27
    %193 = vmatmul.f32.gmra.mxu0 %v24
    %v194 = vpop.f32.mrf.mxu0
    %v195 = vadd.f32 %v141, %v194
    %196 = vmatmul.f32.gmra.mxu0 %v25
    %v197 = vpop.f32.mrf.mxu0
    %v198 = vadd.f32 %v141, %v197
    %199 = vdwg.mxu0
    %200 = vmatpush.msra.mxu0 %v133
    %201 = vmatpush.msra.mxu0 %v126
    %202 = vmatpush.msra.mxu0 %v119
    %203 = vmatpush.msra.mxu0 %v112
    %204 = vmatpush.msra.mxu0 %v105
    %205 = vmatpush.msra.mxu0 %v98
    %206 = vmatpush.msra.mxu0 %v91
    %207 = vmatpush.msra.mxu0 %v84
    %208 = vmatpush.msra.mxu0 %v77
    %209 = vmatpush.msra.mxu0 %v70
    %210 = vmatpush.msra.mxu0 %v63
    %211 = vmatpush.msra.mxu0 %v56
    %212 = vmatpush.msra.mxu0 %v49
    %213 = vmatpush.msra.mxu0 %v42
    %214 = vmatpush.msra.mxu0 %v35
    %215 = vmatpush.msra.mxu0 %v28
    %216 = vmatmul.f32.gmra.mxu0 %v24
    %v217 = vpop.f32.mrf.mxu0
    %v218 = vadd.f32 %v142, %v217
    %219 = vmatmul.f32.gmra.mxu0 %v25
    %v220 = vpop.f32.mrf.mxu0
    %v221 = vadd.f32 %v142, %v220
    %222 = vdwg.mxu0
    %223 = vmatpush.msra.mxu0 %v134
    %224 = vmatpush.msra.mxu0 %v127
    %225 = vmatpush.msra.mxu0 %v120
    %226 = vmatpush.msra.mxu0 %v113
    %227 = vmatpush.msra.mxu0 %v106
    %228 = vmatpush.msra.mxu0 %v99
    %229 = vmatpush.msra.mxu0 %v92
    %230 = vmatpush.msra.mxu0 %v85
    %231 = vmatpush.msra.mxu0 %v78
    %232 = vmatpush.msra.mxu0 %v71
    %233 = vmatpush.msra.mxu0 %v64
    %234 = vmatpush.msra.mxu0 %v57
    %235 = vmatpush.msra.mxu0 %v50
    %236 = vmatpush.msra.mxu0 %v43
    %237 = vmatpush.msra.mxu0 %v36
    %238 = vmatpush.msra.mxu0 %v29
    %239 = vmatmul.f32.gmra.mxu0 %v24
    %v240 = vpop.f32.mrf.mxu0
    %v241 = vadd.f32 %v143, %v240
    %242 = vmatmul.f32.gmra.mxu0 %v25
    %v243 = vpop.f32.mrf.mxu0
    %v244 = vadd.f32 %v143, %v243
    %245 = vdwg.mxu0
    %246 = vmatpush.msra.mxu0 %v135
    %247 = vmatpush.msra.mxu0 %v128
    %248 = vmatpush.msra.mxu0 %v121
    %249 = vmatpush.msra.mxu0 %v114
    %250 = vmatpush.msra.mxu0 %v107
    %251 = vmatpush.msra.mxu0 %v100
    %252 = vmatpush.msra.mxu0 %v93
    %253 = vmatpush.msra.mxu0 %v86
    %254 = vmatpush.msra.mxu0 %v79
    %255 = vmatpush.msra.mxu0 %v72
    %256 = vmatpush.msra.mxu0 %v65
    %257 = vmatpush.msra.mxu0 %v58
    %258 = vmatpush.msra.mxu0 %v51
    %259 = vmatpush.msra.mxu0 %v44
    %260 = vmatpush.msra.mxu0 %v37
    %261 = vmatpush.msra.mxu0 %v30
    %262 = vmatmul.f32.gmra.mxu0 %v24
    %v263 = vpop.f32.mrf.mxu0
    %264 = vmatmul.f32.gmra.mxu0 %v25
    %v265 = vpop.f32.mrf.mxu0
    %v266 = vadd.f32 %v144, %v265
    %267 = vdwg.mxu0
    %268 = vmatpush.msra.mxu0 %v136
    %269 = vmatpush.msra.mxu0 %v129
    %270 = vmatpush.msra.mxu0 %v122
    %271 = vmatpush.msra.mxu0 %v115
    %272 = vmatpush.msra.mxu0 %v108
    %273 = vmatpush.msra.mxu0 %v101
    %274 = vmatpush.msra.mxu0 %v94
    %275 = vmatpush.msra.mxu0 %v87
    %276 = vmatpush.msra.mxu0 %v80
    %277 = vmatpush.msra.mxu0 %v73
    %278 = vmatpush.msra.mxu0 %v66
    %279 = vmatpush.msra.mxu0 %v59
    %280 = vmatpush.msra.mxu0 %v52
    %281 = vmatpush.msra.mxu0 %v45
    %282 = vmatpush.msra.mxu0 %v38
    %283 = vmatpush.msra.mxu0 %v31
    %284 = vmatmul.f32.gmra.mxu0 %v24
    %v285 = vpop.f32.mrf.mxu0
    %286 = vmatmul.f32.gmra.mxu0 %v25
    %v287 = vpop.f32.mrf.mxu0
    %v288 = vadd.f32 %v145, %v287
    %289 = vdwg.mxu0
    %290 = vmatpush.msra.mxu0 %v137
    %291 = vmatpush.msra.mxu0 %v130
    %292 = vmatpush.msra.mxu0 %v123
    %293 = vmatpush.msra.mxu0 %v116
    %294 = vmatpush.msra.mxu0 %v109
    %295 = vmatpush.msra.mxu0 %v102
    %296 = vmatpush.msra.mxu0 %v95
    %297 = vmatpush.msra.mxu0 %v88
    %298 = vmatpush.msra.mxu0 %v81
    %299 = vmatpush.msra.mxu0 %v74
    %300 = vmatpush.msra.mxu0 %v67
    %301 = vmatpush.msra.mxu0 %v60
    %302 = vmatpush.msra.mxu0 %v53
    %303 = vmatpush.msra.mxu0 %v46
    %304 = vmatpush.msra.mxu0 %v39
    %305 = vmatpush.msra.mxu0 %v32
    %306 = vmatmul.f32.gmra.mxu0 %v24
    %v307 = vpop.f32.mrf.mxu0
    %308 = vmatmul.f32.gmra.mxu0 %v25
    %v309 = vpop.f32.mrf.mxu0
    %v310 = vadd.f32 %v146, %v309
    %311 = vdwg.mxu0
    %312 = vst [vmem:[#allocation2] sm:$0xff] %v172
    %313 = vst [vmem:[#allocation2 + $0x8] sm:$0xff] %v195
    %314 = vst [vmem:[#allocation2 + $0x10] sm:$0xff] %v218
    %315 = vst [vmem:[#allocation2 + $0x18] sm:$0xff] %v241
    %316 = vst [vmem:[#allocation2 + $0x20] sm:$0xff] %v175
    %317 = vst [vmem:[#allocation2 + $0x28] sm:$0xff] %v198
    %318 = vst [vmem:[#allocation2 + $0x30] sm:$0xff] %v221
    %319 = vst [vmem:[#allocation2 + $0x38] sm:$0xff] %v244
    %v320 = vxor.u32 %v266, 2147483648
    %v321 = vxor.u32 %v288, 2147483648
    %v322 = vmul.f32 %v320, 1.442695
    %v323 = vpow.pop %v322
    %v324 = vmul.f32 %v321, 1.442695
    %v325 = vpow.pop %v324
    %v326 = vadd.f32 %v323, 1.0
    %v327 = vadd.f32 %v325, 1.0
    %v328 = vrcp.pop %v326
    %v329 = vmul.f32 %v326, %v328
    %v330 = vsub.f32 1.0, %v329
    %v331 = vmul.f32 %v328, %v330
    %v332 = vadd.f32 %v328, %v331
    %vm333 = vweird.f32 %v326
    %vm334 = vweird.f32 %v328
    %vm335 = vmor %vm333, %vm334
    %v336 = vsel %vm335, %v328, %v332
    %v337 = vand.u32 2147483647, %v326
    %vm338 = vcmp.eq.f32.partialorder %v337, 8.507059e+37
    %v339 = vand.u32 %v326, 2147483648
    %v340 = vor.u32 1.1754944e-38, %v339
    %v341 = vsel %vm338, %v340, %v336
    %v342 = vmul.f32 1.0, %v341
    %v343 = vrcp.pop %v327
    %v344 = vmul.f32 %v327, %v343
    %v345 = vsub.f32 1.0, %v344
    %v346 = vmul.f32 %v343, %v345
    %v347 = vadd.f32 %v343, %v346
    %vm348 = vweird.f32 %v327
    %vm349 = vweird.f32 %v343
    %vm350 = vmor %vm348, %vm349
    %v351 = vsel %vm350, %v343, %v347
    %v352 = vand.u32 2147483647, %v327
    %vm353 = vcmp.eq.f32.partialorder %v352, 8.507059e+37
    %v354 = vand.u32 %v327, 2147483648
    %v355 = vor.u32 1.1754944e-38, %v354
    %v356 = vsel %vm353, %v355, %v351
    %v357 = vmul.f32 1.0, %v356
    %v358 = vtanh.pop %v310
    %v359 = vmul.f32 %v342, %v358
    %v360 = vtanh.pop %v359
    %v361 = vmul.f32 %v357, %v360
    %v362 = vld [vmem:[%s2] sm:$0xff]
    %v363 = vld [vmem:[%s2 + $0x8] sm:$0xff]
    %v364 = vld [vmem:[%s2 + $0x10] sm:$0xff]
    %v365 = vld [vmem:[%s2 + $0x18] sm:$0xff]
    %v366 = vld [vmem:[%s2 + $0x20] sm:$0xff]
    %v367 = vld [vmem:[%s2 + $0x28] sm:$0xff]
    %v368 = vld [vmem:[%s2 + $0x30] sm:$0xff]
    %v369 = vld [vmem:[%s2 + $0x38] sm:$0xff]
    %v370 = vld [vmem:[%s2 + $0x40] sm:$0xff]
    %v371 = vld [vmem:[%s2 + $0x48] sm:$0xff]
    %v372 = vld [vmem:[%s2 + $0x50] sm:$0xff]
    %v373 = vld [vmem:[%s2 + $0x58] sm:$0xff]
    %v374 = vld [vmem:[%s2 + $0x60] sm:$0xff]
    %v375 = vld [vmem:[%s2 + $0x68] sm:$0xff]
    %v376 = vld [vmem:[%s2 + $0x70] sm:$0xff]
    %v377 = vld [vmem:[%s2 + $0x78] sm:$0xff]
    %v378 = vld [vmem:[%s2 + $0x80] sm:$0xff]
    %v379 = vld [vmem:[%s2 + $0x88] sm:$0xff]
    %v380 = vld [vmem:[%s2 + $0x90] sm:$0xff]
    %v381 = vld [vmem:[%s2 + $0x98] sm:$0xff]
    %v382 = vld [vmem:[%s2 + $0xa0] sm:$0xff]
    %v383 = vld [vmem:[%s2 + $0xa8] sm:$0xff]
    %v384 = vld [vmem:[%s2 + $0xb0] sm:$0xff]
    %v385 = vld [vmem:[%s2 + $0xb8] sm:$0xff]
    %v386 = vld [vmem:[%s2 + $0xc0] sm:$0xff]
    %v387 = vld [vmem:[%s2 + $0xc8] sm:$0xff]
    %v388 = vld [vmem:[%s2 + $0xd0] sm:$0xff]
    %v389 = vld [vmem:[%s2 + $0xd8] sm:$0xff]
    %v390 = vld [vmem:[%s2 + $0xe0] sm:$0xff]
    %v391 = vld [vmem:[%s2 + $0xe8] sm:$0xff]
    %v392 = vld [vmem:[%s2 + $0xf0] sm:$0xff]
    %v393 = vld [vmem:[%s2 + $0xf8] sm:$0xff]
    %v394 = vld [vmem:[%s2 + $0x100] sm:$0xff]
    %v395 = vld [vmem:[%s2 + $0x108] sm:$0xff]
    %v396 = vld [vmem:[%s2 + $0x110] sm:$0xff]
    %v397 = vld [vmem:[%s2 + $0x118] sm:$0xff]
    %v398 = vld [vmem:[%s2 + $0x120] sm:$0xff]
    %v399 = vld [vmem:[%s2 + $0x128] sm:$0xff]
    %v400 = vld [vmem:[%s2 + $0x130] sm:$0xff]
    %v401 = vld [vmem:[%s2 + $0x138] sm:$0xff]
    %v402 = vld [vmem:[%s2 + $0x140] sm:$0xff]
    %v403 = vld [vmem:[%s2 + $0x148] sm:$0xff]
    %v404 = vld [vmem:[%s2 + $0x150] sm:$0xff]
    %v405 = vld [vmem:[%s2 + $0x158] sm:$0xff]
    %v406 = vld [vmem:[%s2 + $0x160] sm:$0xff]
    %v407 = vld [vmem:[%s2 + $0x168] sm:$0xff]
    %v408 = vld [vmem:[%s2 + $0x170] sm:$0xff]
    %v409 = vld [vmem:[%s2 + $0x178] sm:$0xff]
    %v410 = vld [vmem:[%s2 + $0x180] sm:$0xff]
    %v411 = vld [vmem:[%s2 + $0x188] sm:$0xff]
    %v412 = vld [vmem:[%s2 + $0x190] sm:$0xff]
    %v413 = vld [vmem:[%s2 + $0x198] sm:$0xff]
    %v414 = vld [vmem:[%s2 + $0x1a0] sm:$0xff]
    %v415 = vld [vmem:[%s2 + $0x1a8] sm:$0xff]
    %v416 = vld [vmem:[%s2 + $0x1b0] sm:$0xff]
    %v417 = vld [vmem:[%s2 + $0x1b8] sm:$0xff]
    %v418 = vld [vmem:[%s2 + $0x1c0] sm:$0xff]
    %v419 = vld [vmem:[%s2 + $0x1c8] sm:$0xff]
    %v420 = vld [vmem:[%s2 + $0x1d0] sm:$0xff]
    %v421 = vld [vmem:[%s2 + $0x1d8] sm:$0xff]
    %v422 = vld [vmem:[%s2 + $0x1e0] sm:$0xff]
    %v423 = vld [vmem:[%s2 + $0x1e8] sm:$0xff]
    %v424 = vld [vmem:[%s2 + $0x1f0] sm:$0xff]
    %v425 = vld [vmem:[%s2 + $0x1f8] sm:$0xff]
    %v426 = vld [vmem:[#allocation2] sm:$0x3]
    %v427 = vld [vmem:[#allocation2 + $0x8] sm:$0x3]
    %v428 = vld [vmem:[#allocation2 + $0x10] sm:$0x3]
    %v429 = vld [vmem:[#allocation2 + $0x18] sm:$0x3]
    %430 = vmatpush.msra.mxu0 %v422
    %431 = vmatpush.msra.mxu0 %v418
    %432 = vmatpush.msra.mxu0 %v414
    %433 = vmatpush.msra.mxu0 %v410
    %434 = vmatpush.msra.mxu0 %v406
    %435 = vmatpush.msra.mxu0 %v402
    %436 = vmatpush.msra.mxu0 %v398
    %437 = vmatpush.msra.mxu0 %v394
    %438 = vmatpush.msra.mxu0 %v390
    %439 = vmatpush.msra.mxu0 %v386
    %440 = vmatpush.msra.mxu0 %v382
    %441 = vmatpush.msra.mxu0 %v378
    %442 = vmatpush.msra.mxu0 %v374
    %443 = vmatpush.msra.mxu0 %v370
    %444 = vmatpush.msra.mxu0 %v366
    %445 = vmatpush.msra.mxu0 %v362
    %446 = vmatmul.f32.gmra.mxu0 0.0
    %v447 = vpop.f32.mrf.mxu0
    %v448 = vadd.f32 0.0, %v447
    %449 = vdwg.mxu0
    %450 = vmatpush.msra.mxu0 %v423
    %451 = vmatpush.msra.mxu0 %v419
    %452 = vmatpush.msra.mxu0 %v415
    %453 = vmatpush.msra.mxu0 %v411
    %454 = vmatpush.msra.mxu0 %v407
    %455 = vmatpush.msra.mxu0 %v403
    %456 = vmatpush.msra.mxu0 %v399
    %457 = vmatpush.msra.mxu0 %v395
    %458 = vmatpush.msra.mxu0 %v391
    %459 = vmatpush.msra.mxu0 %v387
    %460 = vmatpush.msra.mxu0 %v383
    %461 = vmatpush.msra.mxu0 %v379
    %462 = vmatpush.msra.mxu0 %v375
    %463 = vmatpush.msra.mxu0 %v371
    %464 = vmatpush.msra.mxu0 %v367
    %465 = vmatpush.msra.mxu0 %v363
    %466 = vmatmul.f32.gmra.mxu0 0.0
    %v467 = vpop.f32.mrf.mxu0
    %v468 = vadd.f32 0.0, %v467
    %469 = vdwg.mxu0
    %470 = vmatpush.msra.mxu0 %v424
    %471 = vmatpush.msra.mxu0 %v420
    %472 = vmatpush.msra.mxu0 %v416
    %473 = vmatpush.msra.mxu0 %v412
    %474 = vmatpush.msra.mxu0 %v408
    %475 = vmatpush.msra.mxu0 %v404
    %476 = vmatpush.msra.mxu0 %v400
    %477 = vmatpush.msra.mxu0 %v396
    %478 = vmatpush.msra.mxu0 %v392
    %479 = vmatpush.msra.mxu0 %v388
    %480 = vmatpush.msra.mxu0 %v384
    %481 = vmatpush.msra.mxu0 %v380
    %482 = vmatpush.msra.mxu0 %v376
    %483 = vmatpush.msra.mxu0 %v372
    %484 = vmatpush.msra.mxu0 %v368
    %485 = vmatpush.msra.mxu0 %v364
    %486 = vmatmul.f32.gmra.mxu0 0.0
    %v487 = vpop.f32.mrf.mxu0
    %v488 = vadd.f32 0.0, %v487
    %489 = vdwg.mxu0
    %490 = vmatpush.msra.mxu0 %v425
    %491 = vmatpush.msra.mxu0 %v421
    %492 = vmatpush.msra.mxu0 %v417
    %493 = vmatpush.msra.mxu0 %v413
    %494 = vmatpush.msra.mxu0 %v409
    %495 = vmatpush.msra.mxu0 %v405
    %496 = vmatpush.msra.mxu0 %v401
    %497 = vmatpush.msra.mxu0 %v397
    %498 = vmatpush.msra.mxu0 %v393
    %499 = vmatpush.msra.mxu0 %v389
    %500 = vmatpush.msra.mxu0 %v385
    %501 = vmatpush.msra.mxu0 %v381
    %502 = vmatpush.msra.mxu0 %v377
    %503 = vmatpush.msra.mxu0 %v373
    %504 = vmatpush.msra.mxu0 %v369
    %505 = vmatpush.msra.mxu0 %v365
    %506 = vmatmul.f32.gmra.mxu0 0.0
    %v507 = vpop.f32.mrf.mxu0
    %v508 = vadd.f32 0.0, %v507
    %509 = vdwg.mxu0
    %v510 = vadd.f32 %v426, %v448
    %v511 = vadd.f32 %v427, %v468
    %v512 = vadd.f32 %v428, %v488
    %v513 = vadd.f32 %v429, %v508
    %v514 = vxor.u32 %v510, 2147483648
    %v515 = vxor.u32 %v511, 2147483648
    %v516 = vxor.u32 %v512, 2147483648
    %v517 = vmul.f32 %v514, 1.442695
    %v518 = vpow.pop %v517
    %v519 = vmul.f32 %v515, 1.442695
    %v520 = vpow.pop %v519
    %v521 = vmul.f32 %v516, 1.442695
    %v522 = vpow.pop %v521
    %v523 = vadd.f32 %v518, 1.0
    %v524 = vadd.f32 %v520, 1.0
    %v525 = vadd.f32 %v522, 1.0
    %v526 = vrcp.pop %v523
    %v527 = vmul.f32 %v523, %v526
    %v528 = vsub.f32 1.0, %v527
    %v529 = vmul.f32 %v526, %v528
    %v530 = vadd.f32 %v526, %v529
    %vm531 = vweird.f32 %v523
    %vm532 = vweird.f32 %v526
    %vm533 = vmor %vm531, %vm532
    %v534 = vsel %vm533, %v526, %v530
    %v535 = vand.u32 2147483647, %v523
    %vm536 = vcmp.eq.f32.partialorder %v535, 8.507059e+37
    %v537 = vand.u32 %v523, 2147483648
    %v538 = vor.u32 1.1754944e-38, %v537
    %v539 = vsel %vm536, %v538, %v534
    %v540 = vmul.f32 1.0, %v539
    %v541 = vrcp.pop %v524
    %v542 = vmul.f32 %v524, %v541
    %v543 = vsub.f32 1.0, %v542
    %v544 = vmul.f32 %v541, %v543
    %v545 = vadd.f32 %v541, %v544
    %vm546 = vweird.f32 %v524
    %vm547 = vweird.f32 %v541
    %vm548 = vmor %vm546, %vm547
    %v549 = vsel %vm548, %v541, %v545
    %v550 = vand.u32 2147483647, %v524
    %vm551 = vcmp.eq.f32.partialorder %v550, 8.507059e+37
    %v552 = vand.u32 %v524, 2147483648
    %v553 = vor.u32 1.1754944e-38, %v552
    %v554 = vsel %vm551, %v553, %v549
    %v555 = vmul.f32 1.0, %v554
    %v556 = vrcp.pop %v525
    %v557 = vmul.f32 %v525, %v556
    %v558 = vsub.f32 1.0, %v557
    %v559 = vmul.f32 %v556, %v558
    %v560 = vadd.f32 %v556, %v559
    %vm561 = vweird.f32 %v525
    %vm562 = vweird.f32 %v556
    %vm563 = vmor %vm561, %vm562
    %v564 = vsel %vm563, %v556, %v560
    %v565 = vand.u32 2147483647, %v525
    %vm566 = vcmp.eq.f32.partialorder %v565, 8.507059e+37
    %v567 = vand.u32 %v525, 2147483648
    %v568 = vor.u32 1.1754944e-38, %v567
    %v569 = vsel %vm566, %v568, %v564
    %v570 = vmul.f32 1.0, %v569
    %v571 = vtanh.pop %v513
    %v572 = vmul.f32 %v555, 0.0
    %v573 = vmul.f32 %v540, %v571
    %v574 = vadd.f32 %v572, %v573
    %v575 = vtanh.pop %v574
    %v576 = vmul.f32 %v570, %v575
    %v577 = vld [vmem:[#allocation2] sm:$0xc]
    %v578 = vld [vmem:[#allocation2 + $0x8] sm:$0xc]
    %v579 = vld [vmem:[#allocation2 + $0x10] sm:$0xc]
    %v580 = vld [vmem:[#allocation2 + $0x18] sm:$0xc]
    %581 = vmatpush.msra.mxu0 %v422
    %582 = vmatpush.msra.mxu0 %v418
    %583 = vmatpush.msra.mxu0 %v414
    %584 = vmatpush.msra.mxu0 %v410
    %585 = vmatpush.msra.mxu0 %v406
    %586 = vmatpush.msra.mxu0 %v402
    %587 = vmatpush.msra.mxu0 %v398
    %588 = vmatpush.msra.mxu0 %v394
    %589 = vmatpush.msra.mxu0 %v390
    %590 = vmatpush.msra.mxu0 %v386
    %591 = vmatpush.msra.mxu0 %v382
    %592 = vmatpush.msra.mxu0 %v378
    %593 = vmatpush.msra.mxu0 %v374
    %594 = vmatpush.msra.mxu0 %v370
    %595 = vmatpush.msra.mxu0 %v366
    %596 = vmatpush.msra.mxu0 %v362
    %597 = vmatmul.f32.gmra.mxu0 %v576
    %v598 = vpop.f32.mrf.mxu0
    %v599 = vadd.f32 0.0, %v598
    %600 = vdwg.mxu0
    %601 = vmatpush.msra.mxu0 %v423
    %602 = vmatpush.msra.mxu0 %v419
    %603 = vmatpush.msra.mxu0 %v415
    %604 = vmatpush.msra.mxu0 %v411
    %605 = vmatpush.msra.mxu0 %v407
    %606 = vmatpush.msra.mxu0 %v403
    %607 = vmatpush.msra.mxu0 %v399
    %608 = vmatpush.msra.mxu0 %v395
    %609 = vmatpush.msra.mxu0 %v391
    %610 = vmatpush.msra.mxu0 %v387
    %611 = vmatpush.msra.mxu0 %v383
    %612 = vmatpush.msra.mxu0 %v379
    %613 = vmatpush.msra.mxu0 %v375
    %614 = vmatpush.msra.mxu0 %v371
    %615 = vmatpush.msra.mxu0 %v367
    %616 = vmatpush.msra.mxu0 %v363
    %617 = vmatmul.f32.gmra.mxu0 %v576
    %v618 = vpop.f32.mrf.mxu0
    %v619 = vadd.f32 0.0, %v618
    %620 = vdwg.mxu0
    %621 = vmatpush.msra.mxu0 %v424
    %622 = vmatpush.msra.mxu0 %v420
    %623 = vmatpush.msra.mxu0 %v416
    %624 = vmatpush.msra.mxu0 %v412
    %625 = vmatpush.msra.mxu0 %v408
    %626 = vmatpush.msra.mxu0 %v404
    %627 = vmatpush.msra.mxu0 %v400
    %628 = vmatpush.msra.mxu0 %v396
    %629 = vmatpush.msra.mxu0 %v392
    %630 = vmatpush.msra.mxu0 %v388
    %631 = vmatpush.msra.mxu0 %v384
    %632 = vmatpush.msra.mxu0 %v380
    %633 = vmatpush.msra.mxu0 %v376
    %634 = vmatpush.msra.mxu0 %v372
    %635 = vmatpush.msra.mxu0 %v368
    %636 = vmatpush.msra.mxu0 %v364
    %637 = vmatmul.f32.gmra.mxu0 %v576
    %v638 = vpop.f32.mrf.mxu0
    %v639 = vadd.f32 0.0, %v638
    %640 = vdwg.mxu0
    %641 = vmatpush.msra.mxu0 %v425
    %642 = vmatpush.msra.mxu0 %v421
    %643 = vmatpush.msra.mxu0 %v417
    %644 = vmatpush.msra.mxu0 %v413
    %645 = vmatpush.msra.mxu0 %v409
    %646 = vmatpush.msra.mxu0 %v405
    %647 = vmatpush.msra.mxu0 %v401
    %648 = vmatpush.msra.mxu0 %v397
    %649 = vmatpush.msra.mxu0 %v393
    %650 = vmatpush.msra.mxu0 %v389
    %651 = vmatpush.msra.mxu0 %v385
    %652 = vmatpush.msra.mxu0 %v381
    %653 = vmatpush.msra.mxu0 %v377
    %654 = vmatpush.msra.mxu0 %v373
    %655 = vmatpush.msra.mxu0 %v369
    %656 = vmatpush.msra.mxu0 %v365
    %657 = vmatmul.f32.gmra.mxu0 %v576
    %v658 = vpop.f32.mrf.mxu0
    %v659 = vadd.f32 0.0, %v658
    %660 = vdwg.mxu0
    %v665 = vrot.slane %v599, 6
    %v666 = vrot.slane %v619, 6
    %v667 = vrot.slane %v639, 6
    %v668 = vrot.slane %v659, 6
    %v673 = vadd.f32 %v577, %v665
    %v674 = vadd.f32 %v578, %v666
    %v675 = vadd.f32 %v579, %v667
    %v676 = vadd.f32 %v580, %v668
    %v677 = vxor.u32 %v673, 2147483648
    %v678 = vxor.u32 %v674, 2147483648
    %v679 = vxor.u32 %v675, 2147483648
    %v680 = vmul.f32 %v677, 1.442695
    %v681 = vpow.pop %v680
    %v682 = vmul.f32 %v678, 1.442695
    %v683 = vpow.pop %v682
    %v684 = vmul.f32 %v679, 1.442695
    %v685 = vpow.pop %v684
    %v686 = vadd.f32 %v681, 1.0
    %v687 = vadd.f32 %v683, 1.0
    %v688 = vadd.f32 %v685, 1.0
    %v689 = vrcp.pop %v686
    %v690 = vmul.f32 %v686, %v689
    %v691 = vsub.f32 1.0, %v690
    %v692 = vmul.f32 %v689, %v691
    %v693 = vadd.f32 %v689, %v692
    %vm694 = vweird.f32 %v686
    %vm695 = vweird.f32 %v689
    %vm696 = vmor %vm694, %vm695
    %v697 = vsel %vm696, %v689, %v693
    %v698 = vand.u32 2147483647, %v686
    %vm699 = vcmp.eq.f32.partialorder %v698, 8.507059e+37
    %v700 = vand.u32 %v686, 2147483648
    %v701 = vor.u32 1.1754944e-38, %v700
    %v702 = vsel %vm699, %v701, %v697
    %v703 = vmul.f32 1.0, %v702
    %v704 = vrcp.pop %v687
    %v705 = vmul.f32 %v687, %v704
    %v706 = vsub.f32 1.0, %v705
    %v707 = vmul.f32 %v704, %v706
    %v708 = vadd.f32 %v704, %v707
    %vm709 = vweird.f32 %v687
    %vm710 = vweird.f32 %v704
    %vm711 = vmor %vm709, %vm710
    %v712 = vsel %vm711, %v704, %v708
    %v713 = vand.u32 2147483647, %v687
    %vm714 = vcmp.eq.f32.partialorder %v713, 8.507059e+37
    %v715 = vand.u32 %v687, 2147483648
    %v716 = vor.u32 1.1754944e-38, %v715
    %v717 = vsel %vm714, %v716, %v712
    %v718 = vmul.f32 1.0, %v717
    %v719 = vrcp.pop %v688
    %v720 = vmul.f32 %v688, %v719
    %v721 = vsub.f32 1.0, %v720
    %v722 = vmul.f32 %v719, %v721
    %v723 = vadd.f32 %v719, %v722
    %vm724 = vweird.f32 %v688
    %vm725 = vweird.f32 %v719
    %vm726 = vmor %vm724, %vm725
    %v727 = vsel %vm726, %v719, %v723
    %v728 = vand.u32 2147483647, %v688
    %vm729 = vcmp.eq.f32.partialorder %v728, 8.507059e+37
    %v730 = vand.u32 %v688, 2147483648
    %v731 = vor.u32 1.1754944e-38, %v730
    %v732 = vsel %vm729, %v731, %v727
    %v733 = vmul.f32 1.0, %v732
    %v734 = vtanh.pop %v676
    %v736 = vrot.slane %v574, 6
    %v738 = vmul.f32 %v718, %v736
    %v739 = vmul.f32 %v703, %v734
    %v740 = vadd.f32 %v738, %v739
    %v741 = vtanh.pop %v740
    %v742 = vmul.f32 %v733, %v741
    %v743 = vld [vmem:[#allocation2] sm:$0x30]
    %v744 = vld [vmem:[#allocation2 + $0x8] sm:$0x30]
    %v745 = vld [vmem:[#allocation2 + $0x10] sm:$0x30]
    %v746 = vld [vmem:[#allocation2 + $0x18] sm:$0x30]
    %v748 = vrot.slane %v742, 2
    %750 = vmatpush.msra.mxu0 %v422
    %751 = vmatpush.msra.mxu0 %v418
    %752 = vmatpush.msra.mxu0 %v414
    %753 = vmatpush.msra.mxu0 %v410
    %754 = vmatpush.msra.mxu0 %v406
    %755 = vmatpush.msra.mxu0 %v402
    %756 = vmatpush.msra.mxu0 %v398
    %757 = vmatpush.msra.mxu0 %v394
    %758 = vmatpush.msra.mxu0 %v390
    %759 = vmatpush.msra.mxu0 %v386
    %760 = vmatpush.msra.mxu0 %v382
    %761 = vmatpush.msra.mxu0 %v378
    %762 = vmatpush.msra.mxu0 %v374
    %763 = vmatpush.msra.mxu0 %v370
    %764 = vmatpush.msra.mxu0 %v366
    %765 = vmatpush.msra.mxu0 %v362
    %766 = vmatmul.f32.gmra.mxu0 %v748
    %v767 = vpop.f32.mrf.mxu0
    %v768 = vadd.f32 0.0, %v767
    %769 = vdwg.mxu0
    %770 = vmatpush.msra.mxu0 %v423
    %771 = vmatpush.msra.mxu0 %v419
    %772 = vmatpush.msra.mxu0 %v415
    %773 = vmatpush.msra.mxu0 %v411
    %774 = vmatpush.msra.mxu0 %v407
    %775 = vmatpush.msra.mxu0 %v403
    %776 = vmatpush.msra.mxu0 %v399
    %777 = vmatpush.msra.mxu0 %v395
    %778 = vmatpush.msra.mxu0 %v391
    %779 = vmatpush.msra.mxu0 %v387
    %780 = vmatpush.msra.mxu0 %v383
    %781 = vmatpush.msra.mxu0 %v379
    %782 = vmatpush.msra.mxu0 %v375
    %783 = vmatpush.msra.mxu0 %v371
    %784 = vmatpush.msra.mxu0 %v367
    %785 = vmatpush.msra.mxu0 %v363
    %786 = vmatmul.f32.gmra.mxu0 %v748
    %v787 = vpop.f32.mrf.mxu0
    %v788 = vadd.f32 0.0, %v787
    %789 = vdwg.mxu0
    %790 = vmatpush.msra.mxu0 %v424
    %791 = vmatpush.msra.mxu0 %v420
    %792 = vmatpush.msra.mxu0 %v416
    %793 = vmatpush.msra.mxu0 %v412
    %794 = vmatpush.msra.mxu0 %v408
    %795 = vmatpush.msra.mxu0 %v404
    %796 = vmatpush.msra.mxu0 %v400
    %797 = vmatpush.msra.mxu0 %v396
    %798 = vmatpush.msra.mxu0 %v392
    %799 = vmatpush.msra.mxu0 %v388
    %800 = vmatpush.msra.mxu0 %v384
    %801 = vmatpush.msra.mxu0 %v380
    %802 = vmatpush.msra.mxu0 %v376
    %803 = vmatpush.msra.mxu0 %v372
    %804 = vmatpush.msra.mxu0 %v368
    %805 = vmatpush.msra.mxu0 %v364
    %806 = vmatmul.f32.gmra.mxu0 %v748
    %v807 = vpop.f32.mrf.mxu0
    %v808 = vadd.f32 0.0, %v807
    %809 = vdwg.mxu0
    %810 = vmatpush.msra.mxu0 %v425
    %811 = vmatpush.msra.mxu0 %v421
    %812 = vmatpush.msra.mxu0 %v417
    %813 = vmatpush.msra.mxu0 %v413
    %814 = vmatpush.msra.mxu0 %v409
    %815 = vmatpush.msra.mxu0 %v405
    %816 = vmatpush.msra.mxu0 %v401
    %817 = vmatpush.msra.mxu0 %v397
    %818 = vmatpush.msra.mxu0 %v393
    %819 = vmatpush.msra.mxu0 %v389
    %820 = vmatpush.msra.mxu0 %v385
    %821 = vmatpush.msra.mxu0 %v381
    %822 = vmatpush.msra.mxu0 %v377
    %823 = vmatpush.msra.mxu0 %v373
    %824 = vmatpush.msra.mxu0 %v369
    %825 = vmatpush.msra.mxu0 %v365
    %826 = vmatmul.f32.gmra.mxu0 %v748
    %v827 = vpop.f32.mrf.mxu0
    %v828 = vadd.f32 0.0, %v827
    %829 = vdwg.mxu0
    %v834 = vrot.slane %v768, 4
    %v835 = vrot.slane %v788, 4
    %v836 = vrot.slane %v808, 4
    %v837 = vrot.slane %v828, 4
    %v842 = vadd.f32 %v743, %v834
    %v843 = vadd.f32 %v744, %v835
    %v844 = vadd.f32 %v745, %v836
    %v845 = vadd.f32 %v746, %v837
    %v846 = vxor.u32 %v842, 2147483648
    %v847 = vxor.u32 %v843, 2147483648
    %v848 = vxor.u32 %v844, 2147483648
    %v849 = vmul.f32 %v846, 1.442695
    %v850 = vpow.pop %v849
    %v851 = vmul.f32 %v847, 1.442695
    %v852 = vpow.pop %v851
    %v853 = vmul.f32 %v848, 1.442695
    %v854 = vpow.pop %v853
    %v855 = vadd.f32 %v850, 1.0
    %v856 = vadd.f32 %v852, 1.0
    %v857 = vadd.f32 %v854, 1.0
    %v858 = vrcp.pop %v855
    %v859 = vmul.f32 %v855, %v858
    %v860 = vsub.f32 1.0, %v859
    %v861 = vmul.f32 %v858, %v860
    %v862 = vadd.f32 %v858, %v861
    %vm863 = vweird.f32 %v855
    %vm864 = vweird.f32 %v858
    %vm865 = vmor %vm863, %vm864
    %v866 = vsel %vm865, %v858, %v862
    %v867 = vand.u32 2147483647, %v855
    %vm868 = vcmp.eq.f32.partialorder %v867, 8.507059e+37
    %v869 = vand.u32 %v855, 2147483648
    %v870 = vor.u32 1.1754944e-38, %v869
    %v871 = vsel %vm868, %v870, %v866
    %v872 = vmul.f32 1.0, %v871
    %v873 = vrcp.pop %v856
    %v874 = vmul.f32 %v856, %v873
    %v875 = vsub.f32 1.0, %v874
    %v876 = vmul.f32 %v873, %v875
    %v877 = vadd.f32 %v873, %v876
    %vm878 = vweird.f32 %v856
    %vm879 = vweird.f32 %v873
    %vm880 = vmor %vm878, %vm879
    %v881 = vsel %vm880, %v873, %v877
    %v882 = vand.u32 2147483647, %v856
    %vm883 = vcmp.eq.f32.partialorder %v882, 8.507059e+37
    %v884 = vand.u32 %v856, 2147483648
    %v885 = vor.u32 1.1754944e-38, %v884
    %v886 = vsel %vm883, %v885, %v881
    %v887 = vmul.f32 1.0, %v886
    %v888 = vrcp.pop %v857
    %v889 = vmul.f32 %v857, %v888
    %v890 = vsub.f32 1.0, %v889
    %v891 = vmul.f32 %v888, %v890
    %v892 = vadd.f32 %v888, %v891
    %vm893 = vweird.f32 %v857
    %vm894 = vweird.f32 %v888
    %vm895 = vmor %vm893, %vm894
    %v896 = vsel %vm895, %v888, %v892
    %v897 = vand.u32 2147483647, %v857
    %vm898 = vcmp.eq.f32.partialorder %v897, 8.507059e+37
    %v899 = vand.u32 %v857, 2147483648
    %v900 = vor.u32 1.1754944e-38, %v899
    %v901 = vsel %vm898, %v900, %v896
    %v902 = vmul.f32 1.0, %v901
    %v903 = vtanh.pop %v845
    %v905 = vrot.slane %v740, 6
    %v907 = vmul.f32 %v887, %v905
    %v908 = vmul.f32 %v872, %v903
    %v909 = vadd.f32 %v907, %v908
    %v910 = vtanh.pop %v909
    %v911 = vmul.f32 %v902, %v910
    %v912 = vld [vmem:[#allocation2] sm:$0xc0]
    %v913 = vld [vmem:[#allocation2 + $0x8] sm:$0xc0]
    %v914 = vld [vmem:[#allocation2 + $0x10] sm:$0xc0]
    %v915 = vld [vmem:[#allocation2 + $0x18] sm:$0xc0]
    %v917 = vrot.slane %v911, 4
    %919 = vmatpush.msra.mxu0 %v422
    %920 = vmatpush.msra.mxu0 %v418
    %921 = vmatpush.msra.mxu0 %v414
    %922 = vmatpush.msra.mxu0 %v410
    %923 = vmatpush.msra.mxu0 %v406
    %924 = vmatpush.msra.mxu0 %v402
    %925 = vmatpush.msra.mxu0 %v398
    %926 = vmatpush.msra.mxu0 %v394
    %927 = vmatpush.msra.mxu0 %v390
    %928 = vmatpush.msra.mxu0 %v386
    %929 = vmatpush.msra.mxu0 %v382
    %930 = vmatpush.msra.mxu0 %v378
    %931 = vmatpush.msra.mxu0 %v374
    %932 = vmatpush.msra.mxu0 %v370
    %933 = vmatpush.msra.mxu0 %v366
    %934 = vmatpush.msra.mxu0 %v362
    %935 = vmatmul.f32.gmra.mxu0 %v917
    %v936 = vpop.f32.mrf.mxu0
    %v937 = vadd.f32 0.0, %v936
    %938 = vdwg.mxu0
    %939 = vmatpush.msra.mxu0 %v423
    %940 = vmatpush.msra.mxu0 %v419
    %941 = vmatpush.msra.mxu0 %v415
    %942 = vmatpush.msra.mxu0 %v411
    %943 = vmatpush.msra.mxu0 %v407
    %944 = vmatpush.msra.mxu0 %v403
    %945 = vmatpush.msra.mxu0 %v399
    %946 = vmatpush.msra.mxu0 %v395
    %947 = vmatpush.msra.mxu0 %v391
    %948 = vmatpush.msra.mxu0 %v387
    %949 = vmatpush.msra.mxu0 %v383
    %950 = vmatpush.msra.mxu0 %v379
    %951 = vmatpush.msra.mxu0 %v375
    %952 = vmatpush.msra.mxu0 %v371
    %953 = vmatpush.msra.mxu0 %v367
    %954 = vmatpush.msra.mxu0 %v363
    %955 = vmatmul.f32.gmra.mxu0 %v917
    %v956 = vpop.f32.mrf.mxu0
    %v957 = vadd.f32 0.0, %v956
    %958 = vdwg.mxu0
    %959 = vmatpush.msra.mxu0 %v424
    %960 = vmatpush.msra.mxu0 %v420
    %961 = vmatpush.msra.mxu0 %v416
    %962 = vmatpush.msra.mxu0 %v412
    %963 = vmatpush.msra.mxu0 %v408
    %964 = vmatpush.msra.mxu0 %v404
    %965 = vmatpush.msra.mxu0 %v400
    %966 = vmatpush.msra.mxu0 %v396
    %967 = vmatpush.msra.mxu0 %v392
    %968 = vmatpush.msra.mxu0 %v388
    %969 = vmatpush.msra.mxu0 %v384
    %970 = vmatpush.msra.mxu0 %v380
    %971 = vmatpush.msra.mxu0 %v376
    %972 = vmatpush.msra.mxu0 %v372
    %973 = vmatpush.msra.mxu0 %v368
    %974 = vmatpush.msra.mxu0 %v364
    %975 = vmatmul.f32.gmra.mxu0 %v917
    %v976 = vpop.f32.mrf.mxu0
    %v977 = vadd.f32 0.0, %v976
    %978 = vdwg.mxu0
    %979 = vmatpush.msra.mxu0 %v425
    %980 = vmatpush.msra.mxu0 %v421
    %981 = vmatpush.msra.mxu0 %v417
    %982 = vmatpush.msra.mxu0 %v413
    %983 = vmatpush.msra.mxu0 %v409
    %984 = vmatpush.msra.mxu0 %v405
    %985 = vmatpush.msra.mxu0 %v401
    %986 = vmatpush.msra.mxu0 %v397
    %987 = vmatpush.msra.mxu0 %v393
    %988 = vmatpush.msra.mxu0 %v389
    %989 = vmatpush.msra.mxu0 %v385
    %990 = vmatpush.msra.mxu0 %v381
    %991 = vmatpush.msra.mxu0 %v377
    %992 = vmatpush.msra.mxu0 %v373
    %993 = vmatpush.msra.mxu0 %v369
    %994 = vmatpush.msra.mxu0 %v365
    %995 = vmatmul.f32.gmra.mxu0 %v917
    %v996 = vpop.f32.mrf.mxu0
    %v997 = vadd.f32 0.0, %v996
    %998 = vdwg.mxu0
    %v1003 = vrot.slane %v937, 2
    %v1004 = vrot.slane %v957, 2
    %v1005 = vrot.slane %v977, 2
    %v1006 = vrot.slane %v997, 2
    %v1011 = vadd.f32 %v912, %v1003
    %v1012 = vadd.f32 %v913, %v1004
    %v1013 = vadd.f32 %v914, %v1005
    %v1014 = vadd.f32 %v915, %v1006
    %v1015 = vxor.u32 %v1011, 2147483648
    %v1016 = vxor.u32 %v1012, 2147483648
    %v1017 = vxor.u32 %v1013, 2147483648
    %v1018 = vmul.f32 %v1015, 1.442695
    %v1019 = vpow.pop %v1018
    %v1020 = vmul.f32 %v1016, 1.442695
    %v1021 = vpow.pop %v1020
    %v1022 = vmul.f32 %v1017, 1.442695
    %v1023 = vpow.pop %v1022
    %v1024 = vadd.f32 %v1019, 1.0
    %v1025 = vadd.f32 %v1021, 1.0
    %v1026 = vadd.f32 %v1023, 1.0
    %v1027 = vrcp.pop %v1024
    %v1028 = vmul.f32 %v1024, %v1027
    %v1029 = vsub.f32 1.0, %v1028
    %v1030 = vmul.f32 %v1027, %v1029
    %v1031 = vadd.f32 %v1027, %v1030
    %vm1032 = vweird.f32 %v1024
    %vm1033 = vweird.f32 %v1027
    %vm1034 = vmor %vm1032, %vm1033
    %v1035 = vsel %vm1034, %v1027, %v1031
    %v1036 = vand.u32 2147483647, %v1024
    %vm1037 = vcmp.eq.f32.partialorder %v1036, 8.507059e+37
    %v1038 = vand.u32 %v1024, 2147483648
    %v1039 = vor.u32 1.1754944e-38, %v1038
    %v1040 = vsel %vm1037, %v1039, %v1035
    %v1041 = vmul.f32 1.0, %v1040
    %v1042 = vrcp.pop %v1025
    %v1043 = vmul.f32 %v1025, %v1042
    %v1044 = vsub.f32 1.0, %v1043
    %v1045 = vmul.f32 %v1042, %v1044
    %v1046 = vadd.f32 %v1042, %v1045
    %vm1047 = vweird.f32 %v1025
    %vm1048 = vweird.f32 %v1042
    %vm1049 = vmor %vm1047, %vm1048
    %v1050 = vsel %vm1049, %v1042, %v1046
    %v1051 = vand.u32 2147483647, %v1025
    %vm1052 = vcmp.eq.f32.partialorder %v1051, 8.507059e+37
    %v1053 = vand.u32 %v1025, 2147483648
    %v1054 = vor.u32 1.1754944e-38, %v1053
    %v1055 = vsel %vm1052, %v1054, %v1050
    %v1056 = vmul.f32 1.0, %v1055
    %v1057 = vrcp.pop %v1026
    %v1058 = vmul.f32 %v1026, %v1057
    %v1059 = vsub.f32 1.0, %v1058
    %v1060 = vmul.f32 %v1057, %v1059
    %v1061 = vadd.f32 %v1057, %v1060
    %vm1062 = vweird.f32 %v1026
    %vm1063 = vweird.f32 %v1057
    %vm1064 = vmor %vm1062, %vm1063
    %v1065 = vsel %vm1064, %v1057, %v1061
    %v1066 = vand.u32 2147483647, %v1026
    %vm1067 = vcmp.eq.f32.partialorder %v1066, 8.507059e+37
    %v1068 = vand.u32 %v1026, 2147483648
    %v1069 = vor.u32 1.1754944e-38, %v1068
    %v1070 = vsel %vm1067, %v1069, %v1065
    %v1071 = vmul.f32 1.0, %v1070
    %v1072 = vtanh.pop %v1014
    %v1074 = vrot.slane %v909, 6
    %v1076 = vmul.f32 %v1056, %v1074
    %v1077 = vmul.f32 %v1041, %v1072
    %v1078 = vadd.f32 %v1076, %v1077
    %v1079 = vtanh.pop %v1078
    %v1080 = vmul.f32 %v1071, %v1079
    %v1081 = vld [vmem:[#allocation2 + $0x20] sm:$0x3]
    %v1082 = vld [vmem:[#allocation2 + $0x28] sm:$0x3]
    %v1083 = vld [vmem:[#allocation2 + $0x30] sm:$0x3]
    %v1084 = vld [vmem:[#allocation2 + $0x38] sm:$0x3]
    %v1086 = vrot.slane %v1080, 6
    %1088 = vmatpush.msra.mxu0 %v422
    %1089 = vmatpush.msra.mxu0 %v418
    %1090 = vmatpush.msra.mxu0 %v414
    %1091 = vmatpush.msra.mxu0 %v410
    %1092 = vmatpush.msra.mxu0 %v406
    %1093 = vmatpush.msra.mxu0 %v402
    %1094 = vmatpush.msra.mxu0 %v398
    %1095 = vmatpush.msra.mxu0 %v394
    %1096 = vmatpush.msra.mxu0 %v390
    %1097 = vmatpush.msra.mxu0 %v386
    %1098 = vmatpush.msra.mxu0 %v382
    %1099 = vmatpush.msra.mxu0 %v378
    %1100 = vmatpush.msra.mxu0 %v374
    %1101 = vmatpush.msra.mxu0 %v370
    %1102 = vmatpush.msra.mxu0 %v366
    %1103 = vmatpush.msra.mxu0 %v362
    %1104 = vmatmul.f32.gmra.mxu0 %v1086
    %v1105 = vpop.f32.mrf.mxu0
    %v1106 = vadd.f32 0.0, %v1105
    %1107 = vdwg.mxu0
    %1108 = vmatpush.msra.mxu0 %v423
    %1109 = vmatpush.msra.mxu0 %v419
    %1110 = vmatpush.msra.mxu0 %v415
    %1111 = vmatpush.msra.mxu0 %v411
    %1112 = vmatpush.msra.mxu0 %v407
    %1113 = vmatpush.msra.mxu0 %v403
    %1114 = vmatpush.msra.mxu0 %v399
    %1115 = vmatpush.msra.mxu0 %v395
    %1116 = vmatpush.msra.mxu0 %v391
    %1117 = vmatpush.msra.mxu0 %v387
    %1118 = vmatpush.msra.mxu0 %v383
    %1119 = vmatpush.msra.mxu0 %v379
    %1120 = vmatpush.msra.mxu0 %v375
    %1121 = vmatpush.msra.mxu0 %v371
    %1122 = vmatpush.msra.mxu0 %v367
    %1123 = vmatpush.msra.mxu0 %v363
    %1124 = vmatmul.f32.gmra.mxu0 %v1086
    %v1125 = vpop.f32.mrf.mxu0
    %v1126 = vadd.f32 0.0, %v1125
    %1127 = vdwg.mxu0
    %1128 = vmatpush.msra.mxu0 %v424
    %1129 = vmatpush.msra.mxu0 %v420
    %1130 = vmatpush.msra.mxu0 %v416
    %1131 = vmatpush.msra.mxu0 %v412
    %1132 = vmatpush.msra.mxu0 %v408
    %1133 = vmatpush.msra.mxu0 %v404
    %1134 = vmatpush.msra.mxu0 %v400
    %1135 = vmatpush.msra.mxu0 %v396
    %1136 = vmatpush.msra.mxu0 %v392
    %1137 = vmatpush.msra.mxu0 %v388
    %1138 = vmatpush.msra.mxu0 %v384
    %1139 = vmatpush.msra.mxu0 %v380
    %1140 = vmatpush.msra.mxu0 %v376
    %1141 = vmatpush.msra.mxu0 %v372
    %1142 = vmatpush.msra.mxu0 %v368
    %1143 = vmatpush.msra.mxu0 %v364
    %1144 = vmatmul.f32.gmra.mxu0 %v1086
    %v1145 = vpop.f32.mrf.mxu0
    %v1146 = vadd.f32 0.0, %v1145
    %1147 = vdwg.mxu0
    %1148 = vmatpush.msra.mxu0 %v425
    %1149 = vmatpush.msra.mxu0 %v421
    %1150 = vmatpush.msra.mxu0 %v417
    %1151 = vmatpush.msra.mxu0 %v413
    %1152 = vmatpush.msra.mxu0 %v409
    %1153 = vmatpush.msra.mxu0 %v405
    %1154 = vmatpush.msra.mxu0 %v401
    %1155 = vmatpush.msra.mxu0 %v397
    %1156 = vmatpush.msra.mxu0 %v393
    %1157 = vmatpush.msra.mxu0 %v389
    %1158 = vmatpush.msra.mxu0 %v385
    %1159 = vmatpush.msra.mxu0 %v381
    %1160 = vmatpush.msra.mxu0 %v377
    %1161 = vmatpush.msra.mxu0 %v373
    %1162 = vmatpush.msra.mxu0 %v369
    %1163 = vmatpush.msra.mxu0 %v365
    %1164 = vmatmul.f32.gmra.mxu0 %v1086
    %v1165 = vpop.f32.mrf.mxu0
    %v1166 = vadd.f32 0.0, %v1165
    %1167 = vdwg.mxu0
    %v1168 = vadd.f32 %v1081, %v1106
    %v1169 = vadd.f32 %v1082, %v1126
    %v1170 = vadd.f32 %v1083, %v1146
    %v1171 = vadd.f32 %v1084, %v1166
    %v1172 = vxor.u32 %v1168, 2147483648
    %v1173 = vxor.u32 %v1169, 2147483648
    %v1174 = vxor.u32 %v1170, 2147483648
    %v1175 = vmul.f32 %v1172, 1.442695
    %v1176 = vpow.pop %v1175
    %v1177 = vmul.f32 %v1173, 1.442695
    %v1178 = vpow.pop %v1177
    %v1179 = vmul.f32 %v1174, 1.442695
    %v1180 = vpow.pop %v1179
    %v1181 = vadd.f32 %v1176, 1.0
    %v1182 = vadd.f32 %v1178, 1.0
    %v1183 = vadd.f32 %v1180, 1.0
    %v1184 = vrcp.pop %v1181
    %v1185 = vmul.f32 %v1181, %v1184
    %v1186 = vsub.f32 1.0, %v1185
    %v1187 = vmul.f32 %v1184, %v1186
    %v1188 = vadd.f32 %v1184, %v1187
    %vm1189 = vweird.f32 %v1181
    %vm1190 = vweird.f32 %v1184
    %vm1191 = vmor %vm1189, %vm1190
    %v1192 = vsel %vm1191, %v1184, %v1188
    %v1193 = vand.u32 2147483647, %v1181
    %vm1194 = vcmp.eq.f32.partialorder %v1193, 8.507059e+37
    %v1195 = vand.u32 %v1181, 2147483648
    %v1196 = vor.u32 1.1754944e-38, %v1195
    %v1197 = vsel %vm1194, %v1196, %v1192
    %v1198 = vmul.f32 1.0, %v1197
    %v1199 = vrcp.pop %v1182
    %v1200 = vmul.f32 %v1182, %v1199
    %v1201 = vsub.f32 1.0, %v1200
    %v1202 = vmul.f32 %v1199, %v1201
    %v1203 = vadd.f32 %v1199, %v1202
    %vm1204 = vweird.f32 %v1182
    %vm1205 = vweird.f32 %v1199
    %vm1206 = vmor %vm1204, %vm1205
    %v1207 = vsel %vm1206, %v1199, %v1203
    %v1208 = vand.u32 2147483647, %v1182
    %vm1209 = vcmp.eq.f32.partialorder %v1208, 8.507059e+37
    %v1210 = vand.u32 %v1182, 2147483648
    %v1211 = vor.u32 1.1754944e-38, %v1210
    %v1212 = vsel %vm1209, %v1211, %v1207
    %v1213 = vmul.f32 1.0, %v1212
    %v1214 = vrcp.pop %v1183
    %v1215 = vmul.f32 %v1183, %v1214
    %v1216 = vsub.f32 1.0, %v1215
    %v1217 = vmul.f32 %v1214, %v1216
    %v1218 = vadd.f32 %v1214, %v1217
    %vm1219 = vweird.f32 %v1183
    %vm1220 = vweird.f32 %v1214
    %vm1221 = vmor %vm1219, %vm1220
    %v1222 = vsel %vm1221, %v1214, %v1218
    %v1223 = vand.u32 2147483647, %v1183
    %vm1224 = vcmp.eq.f32.partialorder %v1223, 8.507059e+37
    %v1225 = vand.u32 %v1183, 2147483648
    %v1226 = vor.u32 1.1754944e-38, %v1225
    %v1227 = vsel %vm1224, %v1226, %v1222
    %v1228 = vmul.f32 1.0, %v1227
    %v1229 = vtanh.pop %v1171
    %v1231 = vrot.slane %v1078, 6
    %v1233 = vmul.f32 %v1213, %v1231
    %v1234 = vmul.f32 %v1198, %v1229
    %v1235 = vadd.f32 %v1233, %v1234
    %v1236 = vtanh.pop %v1235
    %v1237 = vmul.f32 %v1228, %v1236
    %v1238 = vld [vmem:[#allocation2 + $0x20] sm:$0xc]
    %v1239 = vld [vmem:[#allocation2 + $0x28] sm:$0xc]
    %v1240 = vld [vmem:[#allocation2 + $0x30] sm:$0xc]
    %v1241 = vld [vmem:[#allocation2 + $0x38] sm:$0xc]
    %1242 = vmatpush.msra.mxu0 %v422
    %1243 = vmatpush.msra.mxu0 %v418
    %1244 = vmatpush.msra.mxu0 %v414
    %1245 = vmatpush.msra.mxu0 %v410
    %1246 = vmatpush.msra.mxu0 %v406
    %1247 = vmatpush.msra.mxu0 %v402
    %1248 = vmatpush.msra.mxu0 %v398
    %1249 = vmatpush.msra.mxu0 %v394
    %1250 = vmatpush.msra.mxu0 %v390
    %1251 = vmatpush.msra.mxu0 %v386
    %1252 = vmatpush.msra.mxu0 %v382
    %1253 = vmatpush.msra.mxu0 %v378
    %1254 = vmatpush.msra.mxu0 %v374
    %1255 = vmatpush.msra.mxu0 %v370
    %1256 = vmatpush.msra.mxu0 %v366
    %1257 = vmatpush.msra.mxu0 %v362
    %1258 = vmatmul.f32.gmra.mxu0 %v1237
    %v1259 = vpop.f32.mrf.mxu0
    %v1260 = vadd.f32 0.0, %v1259
    %1261 = vdwg.mxu0
    %1262 = vmatpush.msra.mxu0 %v423
    %1263 = vmatpush.msra.mxu0 %v419
    %1264 = vmatpush.msra.mxu0 %v415
    %1265 = vmatpush.msra.mxu0 %v411
    %1266 = vmatpush.msra.mxu0 %v407
    %1267 = vmatpush.msra.mxu0 %v403
    %1268 = vmatpush.msra.mxu0 %v399
    %1269 = vmatpush.msra.mxu0 %v395
    %1270 = vmatpush.msra.mxu0 %v391
    %1271 = vmatpush.msra.mxu0 %v387
    %1272 = vmatpush.msra.mxu0 %v383
    %1273 = vmatpush.msra.mxu0 %v379
    %1274 = vmatpush.msra.mxu0 %v375
    %1275 = vmatpush.msra.mxu0 %v371
    %1276 = vmatpush.msra.mxu0 %v367
    %1277 = vmatpush.msra.mxu0 %v363
    %1278 = vmatmul.f32.gmra.mxu0 %v1237
    %v1279 = vpop.f32.mrf.mxu0
    %v1280 = vadd.f32 0.0, %v1279
    %1281 = vdwg.mxu0
    %1282 = vmatpush.msra.mxu0 %v424
    %1283 = vmatpush.msra.mxu0 %v420
    %1284 = vmatpush.msra.mxu0 %v416
    %1285 = vmatpush.msra.mxu0 %v412
    %1286 = vmatpush.msra.mxu0 %v408
    %1287 = vmatpush.msra.mxu0 %v404
    %1288 = vmatpush.msra.mxu0 %v400
    %1289 = vmatpush.msra.mxu0 %v396
    %1290 = vmatpush.msra.mxu0 %v392
    %1291 = vmatpush.msra.mxu0 %v388
    %1292 = vmatpush.msra.mxu0 %v384
    %1293 = vmatpush.msra.mxu0 %v380
    %1294 = vmatpush.msra.mxu0 %v376
    %1295 = vmatpush.msra.mxu0 %v372
    %1296 = vmatpush.msra.mxu0 %v368
    %1297 = vmatpush.msra.mxu0 %v364
    %1298 = vmatmul.f32.gmra.mxu0 %v1237
    %v1299 = vpop.f32.mrf.mxu0
    %v1300 = vadd.f32 0.0, %v1299
    %1301 = vdwg.mxu0
    %1302 = vmatpush.msra.mxu0 %v425
    %1303 = vmatpush.msra.mxu0 %v421
    %1304 = vmatpush.msra.mxu0 %v417
    %1305 = vmatpush.msra.mxu0 %v413
    %1306 = vmatpush.msra.mxu0 %v409
    %1307 = vmatpush.msra.mxu0 %v405
    %1308 = vmatpush.msra.mxu0 %v401
    %1309 = vmatpush.msra.mxu0 %v397
    %1310 = vmatpush.msra.mxu0 %v393
    %1311 = vmatpush.msra.mxu0 %v389
    %1312 = vmatpush.msra.mxu0 %v385
    %1313 = vmatpush.msra.mxu0 %v381
    %1314 = vmatpush.msra.mxu0 %v377
    %1315 = vmatpush.msra.mxu0 %v373
    %1316 = vmatpush.msra.mxu0 %v369
    %1317 = vmatpush.msra.mxu0 %v365
    %1318 = vmatmul.f32.gmra.mxu0 %v1237
    %v1319 = vpop.f32.mrf.mxu0
    %v1320 = vadd.f32 0.0, %v1319
    %1321 = vdwg.mxu0
    %v1326 = vrot.slane %v1260, 6
    %v1327 = vrot.slane %v1280, 6
    %v1328 = vrot.slane %v1300, 6
    %v1329 = vrot.slane %v1320, 6
    %v1334 = vadd.f32 %v1238, %v1326
    %v1335 = vadd.f32 %v1239, %v1327
    %v1336 = vadd.f32 %v1240, %v1328
    %v1337 = vadd.f32 %v1241, %v1329
    %v1338 = vxor.u32 %v1334, 2147483648
    %v1339 = vxor.u32 %v1335, 2147483648
    %v1340 = vxor.u32 %v1336, 2147483648
    %v1341 = vmul.f32 %v1338, 1.442695
    %v1342 = vpow.pop %v1341
    %v1343 = vmul.f32 %v1339, 1.442695
    %v1344 = vpow.pop %v1343
    %v1345 = vmul.f32 %v1340, 1.442695
    %v1346 = vpow.pop %v1345
    %v1347 = vadd.f32 %v1342, 1.0
    %v1348 = vadd.f32 %v1344, 1.0
    %v1349 = vadd.f32 %v1346, 1.0
    %v1350 = vrcp.pop %v1347
    %v1351 = vmul.f32 %v1347, %v1350
    %v1352 = vsub.f32 1.0, %v1351
    %v1353 = vmul.f32 %v1350, %v1352
    %v1354 = vadd.f32 %v1350, %v1353
    %vm1355 = vweird.f32 %v1347
    %vm1356 = vweird.f32 %v1350
    %vm1357 = vmor %vm1355, %vm1356
    %v1358 = vsel %vm1357, %v1350, %v1354
    %v1359 = vand.u32 2147483647, %v1347
    %vm1360 = vcmp.eq.f32.partialorder %v1359, 8.507059e+37
    %v1361 = vand.u32 %v1347, 2147483648
    %v1362 = vor.u32 1.1754944e-38, %v1361
    %v1363 = vsel %vm1360, %v1362, %v1358
    %v1364 = vmul.f32 1.0, %v1363
    %v1365 = vrcp.pop %v1348
    %v1366 = vmul.f32 %v1348, %v1365
    %v1367 = vsub.f32 1.0, %v1366
    %v1368 = vmul.f32 %v1365, %v1367
    %v1369 = vadd.f32 %v1365, %v1368
    %vm1370 = vweird.f32 %v1348
    %vm1371 = vweird.f32 %v1365
    %vm1372 = vmor %vm1370, %vm1371
    %v1373 = vsel %vm1372, %v1365, %v1369
    %v1374 = vand.u32 2147483647, %v1348
    %vm1375 = vcmp.eq.f32.partialorder %v1374, 8.507059e+37
    %v1376 = vand.u32 %v1348, 2147483648
    %v1377 = vor.u32 1.1754944e-38, %v1376
    %v1378 = vsel %vm1375, %v1377, %v1373
    %v1379 = vmul.f32 1.0, %v1378
    %v1380 = vrcp.pop %v1349
    %v1381 = vmul.f32 %v1349, %v1380
    %v1382 = vsub.f32 1.0, %v1381
    %v1383 = vmul.f32 %v1380, %v1382
    %v1384 = vadd.f32 %v1380, %v1383
    %vm1385 = vweird.f32 %v1349
    %vm1386 = vweird.f32 %v1380
    %vm1387 = vmor %vm1385, %vm1386
    %v1388 = vsel %vm1387, %v1380, %v1384
    %v1389 = vand.u32 2147483647, %v1349
    %vm1390 = vcmp.eq.f32.partialorder %v1389, 8.507059e+37
    %v1391 = vand.u32 %v1349, 2147483648
    %v1392 = vor.u32 1.1754944e-38, %v1391
    %v1393 = vsel %vm1390, %v1392, %v1388
    %v1394 = vmul.f32 1.0, %v1393
    %v1395 = vtanh.pop %v1337
    %v1397 = vrot.slane %v1235, 6
    %v1399 = vmul.f32 %v1379, %v1397
    %v1400 = vmul.f32 %v1364, %v1395
    %v1401 = vadd.f32 %v1399, %v1400
    %v1402 = vtanh.pop %v1401
    %v1403 = vmul.f32 %v1394, %v1402
    %v1404 = vld [vmem:[#allocation2 + $0x20] sm:$0x30]
    %v1405 = vld [vmem:[#allocation2 + $0x28] sm:$0x30]
    %v1406 = vld [vmem:[#allocation2 + $0x30] sm:$0x30]
    %v1407 = vld [vmem:[#allocation2 + $0x38] sm:$0x30]
    %v1409 = vrot.slane %v1403, 2
    %1411 = vmatpush.msra.mxu0 %v422
    %1412 = vmatpush.msra.mxu0 %v418
    %1413 = vmatpush.msra.mxu0 %v414
    %1414 = vmatpush.msra.mxu0 %v410
    %1415 = vmatpush.msra.mxu0 %v406
    %1416 = vmatpush.msra.mxu0 %v402
    %1417 = vmatpush.msra.mxu0 %v398
    %1418 = vmatpush.msra.mxu0 %v394
    %1419 = vmatpush.msra.mxu0 %v390
    %1420 = vmatpush.msra.mxu0 %v386
    %1421 = vmatpush.msra.mxu0 %v382
    %1422 = vmatpush.msra.mxu0 %v378
    %1423 = vmatpush.msra.mxu0 %v374
    %1424 = vmatpush.msra.mxu0 %v370
    %1425 = vmatpush.msra.mxu0 %v366
    %1426 = vmatpush.msra.mxu0 %v362
    %1427 = vmatmul.f32.gmra.mxu0 %v1409
    %v1428 = vpop.f32.mrf.mxu0
    %v1429 = vadd.f32 0.0, %v1428
    %1430 = vdwg.mxu0
    %1431 = vmatpush.msra.mxu0 %v423
    %1432 = vmatpush.msra.mxu0 %v419
    %1433 = vmatpush.msra.mxu0 %v415
    %1434 = vmatpush.msra.mxu0 %v411
    %1435 = vmatpush.msra.mxu0 %v407
    %1436 = vmatpush.msra.mxu0 %v403
    %1437 = vmatpush.msra.mxu0 %v399
    %1438 = vmatpush.msra.mxu0 %v395
    %1439 = vmatpush.msra.mxu0 %v391
    %1440 = vmatpush.msra.mxu0 %v387
    %1441 = vmatpush.msra.mxu0 %v383
    %1442 = vmatpush.msra.mxu0 %v379
    %1443 = vmatpush.msra.mxu0 %v375
    %1444 = vmatpush.msra.mxu0 %v371
    %1445 = vmatpush.msra.mxu0 %v367
    %1446 = vmatpush.msra.mxu0 %v363
    %1447 = vmatmul.f32.gmra.mxu0 %v1409
    %v1448 = vpop.f32.mrf.mxu0
    %v1449 = vadd.f32 0.0, %v1448
    %1450 = vdwg.mxu0
    %1451 = vmatpush.msra.mxu0 %v424
    %1452 = vmatpush.msra.mxu0 %v420
    %1453 = vmatpush.msra.mxu0 %v416
    %1454 = vmatpush.msra.mxu0 %v412
    %1455 = vmatpush.msra.mxu0 %v408
    %1456 = vmatpush.msra.mxu0 %v404
    %1457 = vmatpush.msra.mxu0 %v400
    %1458 = vmatpush.msra.mxu0 %v396
    %1459 = vmatpush.msra.mxu0 %v392
    %1460 = vmatpush.msra.mxu0 %v388
    %1461 = vmatpush.msra.mxu0 %v384
    %1462 = vmatpush.msra.mxu0 %v380
    %1463 = vmatpush.msra.mxu0 %v376
    %1464 = vmatpush.msra.mxu0 %v372
    %1465 = vmatpush.msra.mxu0 %v368
    %1466 = vmatpush.msra.mxu0 %v364
    %1467 = vmatmul.f32.gmra.mxu0 %v1409
    %v1468 = vpop.f32.mrf.mxu0
    %v1469 = vadd.f32 0.0, %v1468
    %1470 = vdwg.mxu0
    %1471 = vmatpush.msra.mxu0 %v425
    %1472 = vmatpush.msra.mxu0 %v421
    %1473 = vmatpush.msra.mxu0 %v417
    %1474 = vmatpush.msra.mxu0 %v413
    %1475 = vmatpush.msra.mxu0 %v409
    %1476 = vmatpush.msra.mxu0 %v405
    %1477 = vmatpush.msra.mxu0 %v401
    %1478 = vmatpush.msra.mxu0 %v397
    %1479 = vmatpush.msra.mxu0 %v393
    %1480 = vmatpush.msra.mxu0 %v389
    %1481 = vmatpush.msra.mxu0 %v385
    %1482 = vmatpush.msra.mxu0 %v381
    %1483 = vmatpush.msra.mxu0 %v377
    %1484 = vmatpush.msra.mxu0 %v373
    %1485 = vmatpush.msra.mxu0 %v369
    %1486 = vmatpush.msra.mxu0 %v365
    %1487 = vmatmul.f32.gmra.mxu0 %v1409
    %v1488 = vpop.f32.mrf.mxu0
    %v1489 = vadd.f32 0.0, %v1488
    %1490 = vdwg.mxu0
    %v1495 = vrot.slane %v1429, 4
    %v1496 = vrot.slane %v1449, 4
    %v1497 = vrot.slane %v1469, 4
    %v1498 = vrot.slane %v1489, 4
    %v1503 = vadd.f32 %v1404, %v1495
    %v1504 = vadd.f32 %v1405, %v1496
    %v1505 = vadd.f32 %v1406, %v1497
    %v1506 = vadd.f32 %v1407, %v1498
    %v1507 = vxor.u32 %v1503, 2147483648
    %v1508 = vxor.u32 %v1504, 2147483648
    %v1509 = vxor.u32 %v1505, 2147483648
    %v1510 = vmul.f32 %v1507, 1.442695
    %v1511 = vpow.pop %v1510
    %v1512 = vmul.f32 %v1508, 1.442695
    %v1513 = vpow.pop %v1512
    %v1514 = vmul.f32 %v1509, 1.442695
    %v1515 = vpow.pop %v1514
    %v1516 = vadd.f32 %v1511, 1.0
    %v1517 = vadd.f32 %v1513, 1.0
    %v1518 = vadd.f32 %v1515, 1.0
    %v1519 = vrcp.pop %v1516
    %v1520 = vmul.f32 %v1516, %v1519
    %v1521 = vsub.f32 1.0, %v1520
    %v1522 = vmul.f32 %v1519, %v1521
    %v1523 = vadd.f32 %v1519, %v1522
    %vm1524 = vweird.f32 %v1516
    %vm1525 = vweird.f32 %v1519
    %vm1526 = vmor %vm1524, %vm1525
    %v1527 = vsel %vm1526, %v1519, %v1523
    %v1528 = vand.u32 2147483647, %v1516
    %vm1529 = vcmp.eq.f32.partialorder %v1528, 8.507059e+37
    %v1530 = vand.u32 %v1516, 2147483648
    %v1531 = vor.u32 1.1754944e-38, %v1530
    %v1532 = vsel %vm1529, %v1531, %v1527
    %v1533 = vmul.f32 1.0, %v1532
    %v1534 = vrcp.pop %v1517
    %v1535 = vmul.f32 %v1517, %v1534
    %v1536 = vsub.f32 1.0, %v1535
    %v1537 = vmul.f32 %v1534, %v1536
    %v1538 = vadd.f32 %v1534, %v1537
    %vm1539 = vweird.f32 %v1517
    %vm1540 = vweird.f32 %v1534
    %vm1541 = vmor %vm1539, %vm1540
    %v1542 = vsel %vm1541, %v1534, %v1538
    %v1543 = vand.u32 2147483647, %v1517
    %vm1544 = vcmp.eq.f32.partialorder %v1543, 8.507059e+37
    %v1545 = vand.u32 %v1517, 2147483648
    %v1546 = vor.u32 1.1754944e-38, %v1545
    %v1547 = vsel %vm1544, %v1546, %v1542
    %v1548 = vmul.f32 1.0, %v1547
    %v1549 = vrcp.pop %v1518
    %v1550 = vmul.f32 %v1518, %v1549
    %v1551 = vsub.f32 1.0, %v1550
    %v1552 = vmul.f32 %v1549, %v1551
    %v1553 = vadd.f32 %v1549, %v1552
    %vm1554 = vweird.f32 %v1518
    %vm1555 = vweird.f32 %v1549
    %vm1556 = vmor %vm1554, %vm1555
    %v1557 = vsel %vm1556, %v1549, %v1553
    %v1558 = vand.u32 2147483647, %v1518
    %vm1559 = vcmp.eq.f32.partialorder %v1558, 8.507059e+37
    %v1560 = vand.u32 %v1518, 2147483648
    %v1561 = vor.u32 1.1754944e-38, %v1560
    %v1562 = vsel %vm1559, %v1561, %v1557
    %v1563 = vmul.f32 1.0, %v1562
    %v1564 = vtanh.pop %v1506
    %v1566 = vrot.slane %v1401, 6
    %v1568 = vmul.f32 %v1548, %v1566
    %v1569 = vmul.f32 %v1533, %v1564
    %v1570 = vadd.f32 %v1568, %v1569
    %v1571 = vtanh.pop %v1570
    %v1572 = vmul.f32 %v1563, %v1571
    %v1573 = vld [vmem:[#allocation2 + $0x20] sm:$0xc0]
    %v1574 = vld [vmem:[#allocation2 + $0x28] sm:$0xc0]
    %v1575 = vld [vmem:[#allocation2 + $0x30] sm:$0xc0]
    %v1576 = vld [vmem:[#allocation2 + $0x38] sm:$0xc0]
    %v1578 = vrot.slane %v1572, 4
    %1580 = vmatpush.msra.mxu0 %v422
    %1581 = vmatpush.msra.mxu0 %v418
    %1582 = vmatpush.msra.mxu0 %v414
    %1583 = vmatpush.msra.mxu0 %v410
    %1584 = vmatpush.msra.mxu0 %v406
    %1585 = vmatpush.msra.mxu0 %v402
    %1586 = vmatpush.msra.mxu0 %v398
    %1587 = vmatpush.msra.mxu0 %v394
    %1588 = vmatpush.msra.mxu0 %v390
    %1589 = vmatpush.msra.mxu0 %v386
    %1590 = vmatpush.msra.mxu0 %v382
    %1591 = vmatpush.msra.mxu0 %v378
    %1592 = vmatpush.msra.mxu0 %v374
    %1593 = vmatpush.msra.mxu0 %v370
    %1594 = vmatpush.msra.mxu0 %v366
    %1595 = vmatpush.msra.mxu0 %v362
    %1596 = vmatmul.f32.gmra.mxu0 %v1578
    %v1597 = vpop.f32.mrf.mxu0
    %v1598 = vadd.f32 0.0, %v1597
    %1599 = vdwg.mxu0
    %1600 = vmatpush.msra.mxu0 %v423
    %1601 = vmatpush.msra.mxu0 %v419
    %1602 = vmatpush.msra.mxu0 %v415
    %1603 = vmatpush.msra.mxu0 %v411
    %1604 = vmatpush.msra.mxu0 %v407
    %1605 = vmatpush.msra.mxu0 %v403
    %1606 = vmatpush.msra.mxu0 %v399
    %1607 = vmatpush.msra.mxu0 %v395
    %1608 = vmatpush.msra.mxu0 %v391
    %1609 = vmatpush.msra.mxu0 %v387
    %1610 = vmatpush.msra.mxu0 %v383
    %1611 = vmatpush.msra.mxu0 %v379
    %1612 = vmatpush.msra.mxu0 %v375
    %1613 = vmatpush.msra.mxu0 %v371
    %1614 = vmatpush.msra.mxu0 %v367
    %1615 = vmatpush.msra.mxu0 %v363
    %1616 = vmatmul.f32.gmra.mxu0 %v1578
    %v1617 = vpop.f32.mrf.mxu0
    %v1618 = vadd.f32 0.0, %v1617
    %1619 = vdwg.mxu0
    %1620 = vmatpush.msra.mxu0 %v424
    %1621 = vmatpush.msra.mxu0 %v420
    %1622 = vmatpush.msra.mxu0 %v416
    %1623 = vmatpush.msra.mxu0 %v412
    %1624 = vmatpush.msra.mxu0 %v408
    %1625 = vmatpush.msra.mxu0 %v404
    %1626 = vmatpush.msra.mxu0 %v400
    %1627 = vmatpush.msra.mxu0 %v396
    %1628 = vmatpush.msra.mxu0 %v392
    %1629 = vmatpush.msra.mxu0 %v388
    %1630 = vmatpush.msra.mxu0 %v384
    %1631 = vmatpush.msra.mxu0 %v380
    %1632 = vmatpush.msra.mxu0 %v376
    %1633 = vmatpush.msra.mxu0 %v372
    %1634 = vmatpush.msra.mxu0 %v368
    %1635 = vmatpush.msra.mxu0 %v364
    %1636 = vmatmul.f32.gmra.mxu0 %v1578
    %v1637 = vpop.f32.mrf.mxu0
    %v1638 = vadd.f32 0.0, %v1637
    %1639 = vdwg.mxu0
    %1640 = vmatpush.msra.mxu0 %v425
    %1641 = vmatpush.msra.mxu0 %v421
    %1642 = vmatpush.msra.mxu0 %v417
    %1643 = vmatpush.msra.mxu0 %v413
    %1644 = vmatpush.msra.mxu0 %v409
    %1645 = vmatpush.msra.mxu0 %v405
    %1646 = vmatpush.msra.mxu0 %v401
    %1647 = vmatpush.msra.mxu0 %v397
    %1648 = vmatpush.msra.mxu0 %v393
    %1649 = vmatpush.msra.mxu0 %v389
    %1650 = vmatpush.msra.mxu0 %v385
    %1651 = vmatpush.msra.mxu0 %v381
    %1652 = vmatpush.msra.mxu0 %v377
    %1653 = vmatpush.msra.mxu0 %v373
    %1654 = vmatpush.msra.mxu0 %v369
    %1655 = vmatpush.msra.mxu0 %v365
    %1656 = vmatmul.f32.gmra.mxu0 %v1578
    %v1657 = vpop.f32.mrf.mxu0
    %v1658 = vadd.f32 0.0, %v1657
    %1659 = vdwg.mxu0
    %v1664 = vrot.slane %v1598, 2
    %v1665 = vrot.slane %v1618, 2
    %v1666 = vrot.slane %v1638, 2
    %v1667 = vrot.slane %v1658, 2
    %v1672 = vadd.f32 %v1573, %v1664
    %v1673 = vadd.f32 %v1574, %v1665
    %v1674 = vadd.f32 %v1575, %v1666
    %v1675 = vadd.f32 %v1576, %v1667
    %v1676 = vxor.u32 %v1672, 2147483648
    %v1677 = vxor.u32 %v1673, 2147483648
    %v1678 = vxor.u32 %v1674, 2147483648
    %v1679 = vmul.f32 %v1676, 1.442695
    %v1680 = vpow.pop %v1679
    %v1681 = vmul.f32 %v1677, 1.442695
    %v1682 = vpow.pop %v1681
    %v1683 = vmul.f32 %v1678, 1.442695
    %v1684 = vpow.pop %v1683
    %v1685 = vadd.f32 %v1680, 1.0
    %v1686 = vadd.f32 %v1682, 1.0
    %v1687 = vadd.f32 %v1684, 1.0
    %v1688 = vrcp.pop %v1685
    %v1689 = vmul.f32 %v1685, %v1688
    %v1690 = vsub.f32 1.0, %v1689
    %v1691 = vmul.f32 %v1688, %v1690
    %v1692 = vadd.f32 %v1688, %v1691
    %vm1693 = vweird.f32 %v1685
    %vm1694 = vweird.f32 %v1688
    %vm1695 = vmor %vm1693, %vm1694
    %v1696 = vsel %vm1695, %v1688, %v1692
    %v1697 = vand.u32 2147483647, %v1685
    %vm1698 = vcmp.eq.f32.partialorder %v1697, 8.507059e+37
    %v1699 = vand.u32 %v1685, 2147483648
    %v1700 = vor.u32 1.1754944e-38, %v1699
    %v1701 = vsel %vm1698, %v1700, %v1696
    %v1702 = vmul.f32 1.0, %v1701
    %v1703 = vrcp.pop %v1686
    %v1704 = vmul.f32 %v1686, %v1703
    %v1705 = vsub.f32 1.0, %v1704
    %v1706 = vmul.f32 %v1703, %v1705
    %v1707 = vadd.f32 %v1703, %v1706
    %vm1708 = vweird.f32 %v1686
    %vm1709 = vweird.f32 %v1703
    %vm1710 = vmor %vm1708, %vm1709
    %v1711 = vsel %vm1710, %v1703, %v1707
    %v1712 = vand.u32 2147483647, %v1686
    %vm1713 = vcmp.eq.f32.partialorder %v1712, 8.507059e+37
    %v1714 = vand.u32 %v1686, 2147483648
    %v1715 = vor.u32 1.1754944e-38, %v1714
    %v1716 = vsel %vm1713, %v1715, %v1711
    %v1717 = vmul.f32 1.0, %v1716
    %v1718 = vrcp.pop %v1687
    %v1719 = vmul.f32 %v1687, %v1718
    %v1720 = vsub.f32 1.0, %v1719
    %v1721 = vmul.f32 %v1718, %v1720
    %v1722 = vadd.f32 %v1718, %v1721
    %vm1723 = vweird.f32 %v1687
    %vm1724 = vweird.f32 %v1718
    %vm1725 = vmor %vm1723, %vm1724
    %v1726 = vsel %vm1725, %v1718, %v1722
    %v1727 = vand.u32 2147483647, %v1687
    %vm1728 = vcmp.eq.f32.partialorder %v1727, 8.507059e+37
    %v1729 = vand.u32 %v1687, 2147483648
    %v1730 = vor.u32 1.1754944e-38, %v1729
    %v1731 = vsel %vm1728, %v1730, %v1726
    %v1732 = vmul.f32 1.0, %v1731
    %v1733 = vtanh.pop %v1675
    %v1735 = vrot.slane %v1570, 6
    %v1737 = vmul.f32 %v1717, %v1735
    %v1738 = vmul.f32 %v1702, %v1733
    %v1739 = vadd.f32 %v1737, %v1738
    %v1740 = vtanh.pop %v1739
    %v1741 = vmul.f32 %v1732, %v1740
    %v1742 = vld [vmem:[%s4] sm:$0xff]
    %v1743 = vld [vmem:[%s4 + $0x8] sm:$0xff]
    %v1744 = vld [vmem:[%s4 + $0x10] sm:$0xff]
    %v1745 = vld [vmem:[%s4 + $0x18] sm:$0xff]
    %v1746 = vld [vmem:[%s4 + $0x20] sm:$0xff]
    %v1747 = vld [vmem:[%s4 + $0x28] sm:$0xff]
    %v1748 = vld [vmem:[%s4 + $0x30] sm:$0xff]
    %v1749 = vld [vmem:[%s4 + $0x38] sm:$0xff]
    %v1750 = vld [vmem:[%s4 + $0x40] sm:$0xff]
    %v1751 = vld [vmem:[%s4 + $0x48] sm:$0xff]
    %v1752 = vld [vmem:[%s4 + $0x50] sm:$0xff]
    %v1753 = vld [vmem:[%s4 + $0x58] sm:$0xff]
    %v1754 = vld [vmem:[%s4 + $0x60] sm:$0xff]
    %v1755 = vld [vmem:[%s4 + $0x68] sm:$0xff]
    %v1756 = vld [vmem:[%s4 + $0x70] sm:$0xff]
    %v1757 = vld [vmem:[%s4 + $0x78] sm:$0xff]
    %v1758 = vld [vmem:[%s4 + $0x80] sm:$0xff]
    %v1759 = vld [vmem:[%s4 + $0x88] sm:$0xff]
    %v1760 = vld [vmem:[%s4 + $0x90] sm:$0xff]
    %v1761 = vld [vmem:[%s4 + $0x98] sm:$0xff]
    %v1762 = vld [vmem:[%s4 + $0xa0] sm:$0xff]
    %v1763 = vld [vmem:[%s4 + $0xa8] sm:$0xff]
    %v1764 = vld [vmem:[%s4 + $0xb0] sm:$0xff]
    %v1765 = vld [vmem:[%s4 + $0xb8] sm:$0xff]
    %v1766 = vld [vmem:[%s4 + $0xc0] sm:$0xff]
    %v1767 = vld [vmem:[%s4 + $0xc8] sm:$0xff]
    %v1768 = vld [vmem:[%s4 + $0xd0] sm:$0xff]
    %v1769 = vld [vmem:[%s4 + $0xd8] sm:$0xff]
    %v1770 = vld [vmem:[%s4 + $0xe0] sm:$0xff]
    %v1771 = vld [vmem:[%s4 + $0xe8] sm:$0xff]
    %v1772 = vld [vmem:[%s4 + $0xf0] sm:$0xff]
    %v1773 = vld [vmem:[%s4 + $0xf8] sm:$0xff]
    %v1775 = vrot.slane %v361, 6
    %1777 = vmatpush.msra.mxu0 %v1773
    %1778 = vmatpush.msra.mxu0 %v1772
    %1779 = vmatpush.msra.mxu0 %v1771
    %1780 = vmatpush.msra.mxu0 %v1770
    %1781 = vmatpush.msra.mxu0 %v1769
    %1782 = vmatpush.msra.mxu0 %v1768
    %1783 = vmatpush.msra.mxu0 %v1767
    %1784 = vmatpush.msra.mxu0 %v1766
    %1785 = vmatpush.msra.mxu0 %v1765
    %1786 = vmatpush.msra.mxu0 %v1764
    %1787 = vmatpush.msra.mxu0 %v1763
    %1788 = vmatpush.msra.mxu0 %v1762
    %1789 = vmatpush.msra.mxu0 %v1761
    %1790 = vmatpush.msra.mxu0 %v1760
    %1791 = vmatpush.msra.mxu0 %v1759
    %1792 = vmatpush.msra.mxu0 %v1758
    %1793 = vmatmul.f32.gmra.mxu0 %v1775
    %v1794 = vpop.f32.mrf.mxu0
    %v1795 = vadd.f32 0.0, %v1794
    %1796 = vdwg.mxu0
    %v1798 = vrot.slane %v1741, 6
    %1800 = vmatpush.msra.mxu0 %v1757
    %1801 = vmatpush.msra.mxu0 %v1756
    %1802 = vmatpush.msra.mxu0 %v1755
    %1803 = vmatpush.msra.mxu0 %v1754
    %1804 = vmatpush.msra.mxu0 %v1753
    %1805 = vmatpush.msra.mxu0 %v1752
    %1806 = vmatpush.msra.mxu0 %v1751
    %1807 = vmatpush.msra.mxu0 %v1750
    %1808 = vmatpush.msra.mxu0 %v1749
    %1809 = vmatpush.msra.mxu0 %v1748
    %1810 = vmatpush.msra.mxu0 %v1747
    %1811 = vmatpush.msra.mxu0 %v1746
    %1812 = vmatpush.msra.mxu0 %v1745
    %1813 = vmatpush.msra.mxu0 %v1744
    %1814 = vmatpush.msra.mxu0 %v1743
    %1815 = vmatpush.msra.mxu0 %v1742
    %1816 = vmatmul.f32.gmra.mxu0 %v1798
    %v1817 = vpop.f32.mrf.mxu0
    %v1818 = vadd.f32 %v1795, %v1817
    %1819 = vdwg.mxu0
    %v1820 = vld [vmem:[%s5] sm:$0x1]
    %v1822 = vperm.slane %v1820, 0
    %v1824 = vadd.f32 %v1818, %v1822
    %vm1825 = vcmask 50176
    %1826 = vst.msk [vmem:[#allocation3] sm:$0x3] %vm1825, %v1824
    // Predicated region
    $region26: #{bidirectional_lstm_action_recognition.1} parent=1 // pred_check
      _
    $region27: #{bidirectional_lstm_action_recognition.1} parent=1 // pred_check_branch
      %1828 = sbr.rel (0) target = $region29
    $region28: #{bidirectional_lstm_action_recognition.1} parent=1 // pred_region
      %1830 = vsyncadd [#allocation4], 0
      %s1832 = sshll.u32 [#allocation3], 4
      %s1833 = int_to_ptr.vmem [resolvable:$true] %s1832
      %s1834 = sshll.u32 %s6, 4
      %s1835 = int_to_ptr.hbm [resolvable:$true] %s1834
      %1837 = dma.vmem_to_hbm [thread:$0]  %s1833, 32, %s1835, [#allocation4]
    $region29: #{bidirectional_lstm_action_recognition.1} parent=1 // pred_fallthru
      _
    // Predicated region
    $region30: #{bidirectional_lstm_action_recognition.1} parent=1 // pred_check
      _
    $region31: #{bidirectional_lstm_action_recognition.1} parent=1 // pred_check_branch
      %1839 = sbr.rel (0) target = $region33
    $region32: #{bidirectional_lstm_action_recognition.1} parent=1 // pred_region
      %1841 = dma.done [#allocation4], 32
    $region33: #{bidirectional_lstm_action_recognition.1} parent=1 // pred_fallthru
      _
    %1842 = vsyncpa [#allocation4], 1

</llo_original>
